<compile_context>
chip_gen: v7x
topology: tpu7x:2x2x1
jax: 0.10.0
libtpu: 0.0.40
codegen_flags: <defaults>
</compile_context>

<pallas_src>
import functools

import numpy as np
import jax
import jax.numpy as jnp
from jax.experimental import pallas as pl
from jax.experimental.pallas import tpu as pltpu


# ----------------------------------------------------------------------------
# Pallas kernel: full LSTM recurrence + output projection.
# ----------------------------------------------------------------------------
def _lstm_kernel(u_ref, w_ih_ref, w_hh_ref, b_ref, w_out_ref, b_out_ref,
                 y_ref, h_all_ref):
    B, TI = u_ref.shape
    I, G = w_ih_ref.shape          # G == 4*H (single 128-lane block for H=32)
    H = w_hh_ref.shape[0]
    T = TI // I

    u = u_ref[...]                 # (B, T*I) f32, loaded once, stays in vregs
    w_ih = w_ih_ref[...]           # (I, G)   f32
    w_hh = w_hh_ref[...]           # (H, G)   bf16 -> single-pass MXU
    b = b_ref[...]                 # (1, G)   f32

    h = jnp.zeros((B, H), jnp.float32)
    c = jnp.zeros((B, H), jnp.float32)

    # Fully-unrolled recurrence (T is small and static).  Per step only the
    # cast(h), the recurrent dot, the tanh and the elementwise gate math sit
    # on the serial dependency chain; x_t @ W_ih + b is independent of h and
    # is scheduled off-chain by the compiler.
    for t in range(T):
        x_t = u[:, t * I:(t + 1) * I]                       # static lane slice
        x_proj = jnp.dot(x_t, w_ih,
                         preferred_element_type=jnp.float32) + b
        pre = x_proj + jnp.dot(h.astype(jnp.bfloat16), w_hh,
                               preferred_element_type=jnp.float32)
        t_all = jnp.tanh(pre)      # one EUP pass for all four packed gates
        # PyTorch gate order i, f, g, o.  The i/f/o weight columns and bias
        # were pre-scaled by 0.5, so sigmoid(x) == 0.5 * tanh(0.5 x) + 0.5.
        i_g = 0.5 * t_all[:, 0 * H:1 * H] + 0.5
        f_g = 0.5 * t_all[:, 1 * H:2 * H] + 0.5
        g_g = t_all[:, 2 * H:3 * H]
        o_g = 0.5 * t_all[:, 3 * H:4 * H] + 0.5
        c = f_g * c + i_g * g_g
        h = o_g * jnp.tanh(c)
        # Flat time-major history: rows [t*B, (t+1)*B) -- contiguous store,
        # no (T,B,H) slab padding, no reshape repack later.
        h_all_ref[t * B:(t + 1) * B, :] = h

    # Hoisted output head: single matmul against the selected output column.
    y_ref[...] = (jnp.dot(h_all_ref[...], w_out_ref[...],
                          preferred_element_type=jnp.float32)
                  + b_out_ref[...])


# ----------------------------------------------------------------------------
# Host-side parameter prep (run ONCE, outside the jitted forward).
# ----------------------------------------------------------------------------
def prepare_params(params, output_idx):
    w_ih = np.asarray(params["w_ih"], np.float32)        # (4H, I)
    w_hh = np.asarray(params["w_hh"], np.float32)        # (4H, H)
    b = (np.asarray(params["b_ih"], np.float32)
         + np.asarray(params["b_hh"], np.float32))       # (4H,)
    w_out = np.asarray(params["w_out"], np.float32)      # (O, H)
    b_out = np.asarray(params["b_out"], np.float32)      # (O,)

    four_h, _ = w_ih.shape
    H = four_h // 4

    # Sigmoid gates (i, f, o) pre-scaled by 0.5 for the single-tanh trick;
    # g gate (index 2) unscaled.  Gates packed back-to-back: G = 4*H.
    scales = (0.5, 0.5, 1.0, 0.5)
    w_ih_p = np.concatenate(
        [scales[k] * w_ih[k * H:(k + 1) * H, :].T for k in range(4)], axis=1)
    w_hh_p = np.concatenate(
        [scales[k] * w_hh[k * H:(k + 1) * H, :].T for k in range(4)], axis=1)
    b_p = np.concatenate(
        [scales[k] * b[k * H:(k + 1) * H] for k in range(4)])[None, :]

    # Only the selected output column of the Linear head is ever needed.
    w_out_col = w_out[output_idx, :][:, None]            # (H, 1)
    b_out_sel = b_out[output_idx].reshape(1, 1)          # (1, 1)

    return {
        "w_ih": jnp.asarray(w_ih_p, jnp.float32),        # (I, 4H)
        "w_hh": jnp.asarray(w_hh_p, jnp.bfloat16),       # (H, 4H) bf16 weights
        "b": jnp.asarray(b_p, jnp.float32),              # (1, 4H)
        "w_out": jnp.asarray(w_out_col, jnp.float32),    # (H, 1)
        "b_out": jnp.asarray(b_out_sel, jnp.float32),    # (1, 1)
    }


def _lstm_pallas(u_flat, w_ih, w_hh, b, w_out, b_out, *, seq_len):
    """u_flat: (B, T*I) f32 -> y: (T*B, 1) f32, time-major rows."""
    B, TI = u_flat.shape
    I, G = w_ih.shape
    H = w_hh.shape[0]
    T = seq_len

    vmem = pl.BlockSpec(memory_space=pltpu.MemorySpace.VMEM)
    cost = pl.CostEstimate(
        flops=int(2 * T * B * G * (I + H) + 2 * T * B * H),
        transcendentals=int(T * B * (G + H)),
        bytes_accessed=int(4 * (B * TI + I * G + G + H + 1 + T * B)
                           + 2 * H * G),
    )
    return pl.pallas_call(
        _lstm_kernel,
        out_shape=jax.ShapeDtypeStruct((T * B, 1), jnp.float32),
        in_specs=[vmem] * 6,
        out_specs=vmem,
        scratch_shapes=[pltpu.VMEM((T * B, H), jnp.float32)],  # flat h history
        cost_estimate=cost,
    )(u_flat, w_ih, w_hh, b, w_out, b_out)


# ----------------------------------------------------------------------------
# Wrapper reproducing LSTMWrapperSingleOutput.forward
# ----------------------------------------------------------------------------
def lstm_wrapper_single_output(u_in_f, prepped, *, batch_size, input_size):
    # u_in = u_in_f.view(batch_size, -1, input_size)
    u_in = jnp.reshape(u_in_f, (batch_size, -1, input_size))     # (B, T, I)
    B, T, I = u_in.shape
    # Flat batch-major input goes straight into the kernel -- no XLA transpose.
    u_flat = jnp.reshape(u_in, (B, T * I))
    y_tm = _lstm_pallas(u_flat, prepped["w_ih"], prepped["w_hh"], prepped["b"],
                        prepped["w_out"], prepped["b_out"], seq_len=T)
    # y_out[..., idx].view(-1, 1) is batch-major; reorder the T*B scalars.
    y_bt = jnp.transpose(jnp.reshape(y_tm, (T, B)))              # (B, T)
    return jnp.reshape(y_bt, (-1, 1))


# ----------------------------------------------------------------------------
# Pure-JAX f32 reference (mirrors the PyTorch module exactly)
# ----------------------------------------------------------------------------
def _reference(u_in_f, params, *, batch_size, input_size, output_idx):
    u_in = jnp.reshape(u_in_f, (batch_size, -1, input_size))
    B, T, _ = u_in.shape
    H = params["w_hh"].shape[1]
    h = jnp.zeros((B, H), jnp.float32)
    c = jnp.zeros((B, H), jnp.float32)
    ys = []
    for t in range(T):
        x_t = u_in[:, t, :]
        gates = (x_t @ params["w_ih"].T + h @ params["w_hh"].T
                 + params["b_ih"] + params["b_hh"])
        i_g = jax.nn.sigmoid(gates[:, 0 * H:1 * H])
        f_g = jax.nn.sigmoid(gates[:, 1 * H:2 * H])
        g_g = jnp.tanh(gates[:, 2 * H:3 * H])
        o_g = jax.nn.sigmoid(gates[:, 3 * H:4 * H])
        c = f_g * c + i_g * g_g
        h = o_g * jnp.tanh(c)
        ys.append(h @ params["w_out"].T + params["b_out"])
    y_out = jnp.stack(ys, axis=1)                                # (B, T, O)
    return jnp.reshape(y_out[..., output_idx], (-1, 1))


if __name__ == "__main__":
    batch_size = 2
    seq_len = 8
    input_size = 4
    hidden_size = 32
    output_size = 2
    output_idx = 0

    key = jax.random.PRNGKey(0)
    ks = jax.random.split(key, 8)
    scale = 1.0 / jnp.sqrt(hidden_size)
    params = {
        "w_ih": jax.random.uniform(ks[0], (4 * hidden_size, input_size),
                                   jnp.float32, -scale, scale),
        "w_hh": jax.random.uniform(ks[1], (4 * hidden_size, hidden_size),
                                   jnp.float32, -scale, scale),
        "b_ih": jax.random.uniform(ks[2], (4 * hidden_size,),
                                   jnp.float32, -scale, scale),
        "b_hh": jax.random.uniform(ks[3], (4 * hidden_size,),
                                   jnp.float32, -scale, scale),
        "w_out": jax.random.uniform(ks[4], (output_size, hidden_size),
                                    jnp.float32, -scale, scale),
        "b_out": jax.random.uniform(ks[5], (output_size,),
                                    jnp.float32, -scale, scale),
    }

    # Flat input, as the PyTorch wrapper expects (it views it itself).
    u_in_f = jax.random.normal(
        ks[6], (batch_size, seq_len * input_size), jnp.float32)

    # Parameter prep hoisted out of the per-call path: done once, on host.
    prepped = prepare_params(params, output_idx)

    run = jax.jit(functools.partial(
        lstm_wrapper_single_output, batch_size=batch_size,
        input_size=input_size))
    out = jax.block_until_ready(run(u_in_f, prepped))

    ref = _reference(u_in_f, params, batch_size=batch_size,
                     input_size=input_size, output_idx=output_idx)
    assert out.shape == (batch_size * seq_len, 1)
    # bf16 recurrent weights (f32 accumulation) compound ~1e-3 over T=8 steps,
    # so the check uses a correspondingly relaxed tolerance.
    assert jnp.allclose(out, ref, rtol=1e-2, atol=1e-2)

    print("KERNEL_OK")
</pallas_src>

<mosaic_0001>
module attributes {stable_mosaic.version = 11 : i64} {
  func.func @_lstm_kernel(%arg0: memref<2x32xf32, #tpu.memory_space<vmem>>, %arg1: memref<4x128xf32, #tpu.memory_space<vmem>>, %arg2: memref<32x128xbf16, #tpu.memory_space<vmem>>, %arg3: memref<1x128xf32, #tpu.memory_space<vmem>>, %arg4: memref<32x1xf32, #tpu.memory_space<vmem>>, %arg5: memref<1x1xf32, #tpu.memory_space<vmem>>, %arg6: memref<16x1xf32, #tpu.memory_space<vmem>>, %arg7: memref<16x32xf32, #tpu.memory_space<vmem>>) attributes {dimension_semantics = [], scalar_prefetch = 0 : i64, scratch_operands = 1 : i64, tpu.core_type = #tpu.core_type<tc>} {
    %c0 = arith.constant 0 : index
    %c0_0 = arith.constant 0 : index
    %0 = vector.load %arg0[%c0, %c0_0] : memref<2x32xf32, #tpu.memory_space<vmem>>, vector<2x32xf32>
    %c0_1 = arith.constant 0 : index
    %c0_2 = arith.constant 0 : index
    %1 = vector.load %arg1[%c0_1, %c0_2] : memref<4x128xf32, #tpu.memory_space<vmem>>, vector<4x128xf32>
    %c0_3 = arith.constant 0 : index
    %c0_4 = arith.constant 0 : index
    %2 = vector.load %arg2[%c0_3, %c0_4] : memref<32x128xbf16, #tpu.memory_space<vmem>>, vector<32x128xbf16>
    %c0_5 = arith.constant 0 : index
    %c0_6 = arith.constant 0 : index
    %3 = vector.load %arg3[%c0_5, %c0_6] : memref<1x128xf32, #tpu.memory_space<vmem>>, vector<1x128xf32>
    %cst = arith.constant 0.000000e+00 : f32
    %4 = vector.broadcast %cst : f32 to vector<2x32xf32>
    %cst_7 = arith.constant 0.000000e+00 : f32
    %5 = vector.broadcast %cst_7 : f32 to vector<2x32xf32>
    %6 = vector.extract_strided_slice %0 {offsets = [0, 0], sizes = [2, 4], strides = [1, 1]} : vector<2x32xf32> to vector<2x4xf32>
    %cst_8 = arith.constant dense<0.000000e+00> : vector<2x128xf32>
    %7 = tpu.matmul %6, %1, %cst_8 {dimension_numbers = #tpu.dot_dimension_numbers<[1], [0], [0], [1], [0, 0, 1, 1], [], []>} : vector<2x4xf32>, vector<4x128xf32>, vector<2x128xf32> -> vector<2x128xf32>
    %8 = vector.broadcast %3 : vector<1x128xf32> to vector<2x128xf32>
    %9 = arith.addf %7, %8 : vector<2x128xf32>
    %10 = arith.truncf %4 : vector<2x32xf32> to vector<2x32xbf16>
    %cst_9 = arith.constant dense<0.000000e+00> : vector<2x128xf32>
    %11 = tpu.matmul %10, %2, %cst_9 {dimension_numbers = #tpu.dot_dimension_numbers<[1], [0], [0], [1], [0, 0, 1, 1], [], []>} : vector<2x32xbf16>, vector<32x128xbf16>, vector<2x128xf32> -> vector<2x128xf32>
    %12 = arith.addf %9, %11 : vector<2x128xf32>
    %13 = math.tanh %12 : vector<2x128xf32>
    %14 = vector.extract_strided_slice %13 {offsets = [0, 0], sizes = [2, 32], strides = [1, 1]} : vector<2x128xf32> to vector<2x32xf32>
    %cst_10 = arith.constant 5.000000e-01 : f32
    %15 = vector.broadcast %cst_10 : f32 to vector<2x32xf32>
    %16 = arith.mulf %15, %14 : vector<2x32xf32>
    %cst_11 = arith.constant 5.000000e-01 : f32
    %17 = vector.broadcast %cst_11 : f32 to vector<2x32xf32>
    %18 = arith.addf %16, %17 : vector<2x32xf32>
    %19 = vector.extract_strided_slice %13 {offsets = [0, 32], sizes = [2, 32], strides = [1, 1]} : vector<2x128xf32> to vector<2x32xf32>
    %cst_12 = arith.constant 5.000000e-01 : f32
    %20 = vector.broadcast %cst_12 : f32 to vector<2x32xf32>
    %21 = arith.mulf %20, %19 : vector<2x32xf32>
    %cst_13 = arith.constant 5.000000e-01 : f32
    %22 = vector.broadcast %cst_13 : f32 to vector<2x32xf32>
    %23 = arith.addf %21, %22 : vector<2x32xf32>
    %24 = vector.extract_strided_slice %13 {offsets = [0, 64], sizes = [2, 32], strides = [1, 1]} : vector<2x128xf32> to vector<2x32xf32>
    %25 = vector.extract_strided_slice %13 {offsets = [0, 96], sizes = [2, 32], strides = [1, 1]} : vector<2x128xf32> to vector<2x32xf32>
    %cst_14 = arith.constant 5.000000e-01 : f32
    %26 = vector.broadcast %cst_14 : f32 to vector<2x32xf32>
    %27 = arith.mulf %26, %25 : vector<2x32xf32>
    %cst_15 = arith.constant 5.000000e-01 : f32
    %28 = vector.broadcast %cst_15 : f32 to vector<2x32xf32>
    %29 = arith.addf %27, %28 : vector<2x32xf32>
    %30 = arith.mulf %23, %5 : vector<2x32xf32>
    %31 = arith.mulf %18, %24 : vector<2x32xf32>
    %32 = arith.addf %30, %31 : vector<2x32xf32>
    %33 = math.tanh %32 : vector<2x32xf32>
    %34 = arith.mulf %29, %33 : vector<2x32xf32>
    %c0_16 = arith.constant 0 : index
    %c0_17 = arith.constant 0 : index
    %35 = vector.load %arg7[%c0_16, %c0_17] : memref<16x32xf32, #tpu.memory_space<vmem>>, vector<2x32xf32>
    tpu.vector_store %arg7[%c0_16, %c0_17], %34 {strides = array<i32>} : memref<16x32xf32, #tpu.memory_space<vmem>>, vector<2x32xf32>,
    %36 = vector.extract_strided_slice %0 {offsets = [0, 4], sizes = [2, 4], strides = [1, 1]} : vector<2x32xf32> to vector<2x4xf32>
    %cst_18 = arith.constant dense<0.000000e+00> : vector<2x128xf32>
    %37 = tpu.matmul %36, %1, %cst_18 {dimension_numbers = #tpu.dot_dimension_numbers<[1], [0], [0], [1], [0, 0, 1, 1], [], []>} : vector<2x4xf32>, vector<4x128xf32>, vector<2x128xf32> -> vector<2x128xf32>
    %38 = vector.broadcast %3 : vector<1x128xf32> to vector<2x128xf32>
    %39 = arith.addf %37, %38 : vector<2x128xf32>
    %40 = arith.truncf %34 : vector<2x32xf32> to vector<2x32xbf16>
    %cst_19 = arith.constant dense<0.000000e+00> : vector<2x128xf32>
    %41 = tpu.matmul %40, %2, %cst_19 {dimension_numbers = #tpu.dot_dimension_numbers<[1], [0], [0], [1], [0, 0, 1, 1], [], []>} : vector<2x32xbf16>, vector<32x128xbf16>, vector<2x128xf32> -> vector<2x128xf32>
    %42 = arith.addf %39, %41 : vector<2x128xf32>
    %43 = math.tanh %42 : vector<2x128xf32>
    %44 = vector.extract_strided_slice %43 {offsets = [0, 0], sizes = [2, 32], strides = [1, 1]} : vector<2x128xf32> to vector<2x32xf32>
    %cst_20 = arith.constant 5.000000e-01 : f32
    %45 = vector.broadcast %cst_20 : f32 to vector<2x32xf32>
    %46 = arith.mulf %45, %44 : vector<2x32xf32>
    %cst_21 = arith.constant 5.000000e-01 : f32
    %47 = vector.broadcast %cst_21 : f32 to vector<2x32xf32>
    %48 = arith.addf %46, %47 : vector<2x32xf32>
    %49 = vector.extract_strided_slice %43 {offsets = [0, 32], sizes = [2, 32], strides = [1, 1]} : vector<2x128xf32> to vector<2x32xf32>
    %cst_22 = arith.constant 5.000000e-01 : f32
    %50 = vector.broadcast %cst_22 : f32 to vector<2x32xf32>
    %51 = arith.mulf %50, %49 : vector<2x32xf32>
    %cst_23 = arith.constant 5.000000e-01 : f32
    %52 = vector.broadcast %cst_23 : f32 to vector<2x32xf32>
    %53 = arith.addf %51, %52 : vector<2x32xf32>
    %54 = vector.extract_strided_slice %43 {offsets = [0, 64], sizes = [2, 32], strides = [1, 1]} : vector<2x128xf32> to vector<2x32xf32>
    %55 = vector.extract_strided_slice %43 {offsets = [0, 96], sizes = [2, 32], strides = [1, 1]} : vector<2x128xf32> to vector<2x32xf32>
    %cst_24 = arith.constant 5.000000e-01 : f32
    %56 = vector.broadcast %cst_24 : f32 to vector<2x32xf32>
    %57 = arith.mulf %56, %55 : vector<2x32xf32>
    %cst_25 = arith.constant 5.000000e-01 : f32
    %58 = vector.broadcast %cst_25 : f32 to vector<2x32xf32>
    %59 = arith.addf %57, %58 : vector<2x32xf32>
    %60 = arith.mulf %53, %32 : vector<2x32xf32>
    %61 = arith.mulf %48, %54 : vector<2x32xf32>
    %62 = arith.addf %60, %61 : vector<2x32xf32>
    %63 = math.tanh %62 : vector<2x32xf32>
    %64 = arith.mulf %59, %63 : vector<2x32xf32>
    %c2 = arith.constant 2 : index
    %c0_26 = arith.constant 0 : index
    %65 = vector.load %arg7[%c2, %c0_26] : memref<16x32xf32, #tpu.memory_space<vmem>>, vector<2x32xf32>
    tpu.vector_store %arg7[%c2, %c0_26], %64 {strides = array<i32>} : memref<16x32xf32, #tpu.memory_space<vmem>>, vector<2x32xf32>,
    %66 = vector.extract_strided_slice %0 {offsets = [0, 8], sizes = [2, 4], strides = [1, 1]} : vector<2x32xf32> to vector<2x4xf32>
    %cst_27 = arith.constant dense<0.000000e+00> : vector<2x128xf32>
    %67 = tpu.matmul %66, %1, %cst_27 {dimension_numbers = #tpu.dot_dimension_numbers<[1], [0], [0], [1], [0, 0, 1, 1], [], []>} : vector<2x4xf32>, vector<4x128xf32>, vector<2x128xf32> -> vector<2x128xf32>
    %68 = vector.broadcast %3 : vector<1x128xf32> to vector<2x128xf32>
    %69 = arith.addf %67, %68 : vector<2x128xf32>
    %70 = arith.truncf %64 : vector<2x32xf32> to vector<2x32xbf16>
    %cst_28 = arith.constant dense<0.000000e+00> : vector<2x128xf32>
    %71 = tpu.matmul %70, %2, %cst_28 {dimension_numbers = #tpu.dot_dimension_numbers<[1], [0], [0], [1], [0, 0, 1, 1], [], []>} : vector<2x32xbf16>, vector<32x128xbf16>, vector<2x128xf32> -> vector<2x128xf32>
    %72 = arith.addf %69, %71 : vector<2x128xf32>
    %73 = math.tanh %72 : vector<2x128xf32>
    %74 = vector.extract_strided_slice %73 {offsets = [0, 0], sizes = [2, 32], strides = [1, 1]} : vector<2x128xf32> to vector<2x32xf32>
    %cst_29 = arith.constant 5.000000e-01 : f32
    %75 = vector.broadcast %cst_29 : f32 to vector<2x32xf32>
    %76 = arith.mulf %75, %74 : vector<2x32xf32>
    %cst_30 = arith.constant 5.000000e-01 : f32
    %77 = vector.broadcast %cst_30 : f32 to vector<2x32xf32>
    %78 = arith.addf %76, %77 : vector<2x32xf32>
    %79 = vector.extract_strided_slice %73 {offsets = [0, 32], sizes = [2, 32], strides = [1, 1]} : vector<2x128xf32> to vector<2x32xf32>
    %cst_31 = arith.constant 5.000000e-01 : f32
    %80 = vector.broadcast %cst_31 : f32 to vector<2x32xf32>
    %81 = arith.mulf %80, %79 : vector<2x32xf32>
    %cst_32 = arith.constant 5.000000e-01 : f32
    %82 = vector.broadcast %cst_32 : f32 to vector<2x32xf32>
    %83 = arith.addf %81, %82 : vector<2x32xf32>
    %84 = vector.extract_strided_slice %73 {offsets = [0, 64], sizes = [2, 32], strides = [1, 1]} : vector<2x128xf32> to vector<2x32xf32>
    %85 = vector.extract_strided_slice %73 {offsets = [0, 96], sizes = [2, 32], strides = [1, 1]} : vector<2x128xf32> to vector<2x32xf32>
    %cst_33 = arith.constant 5.000000e-01 : f32
    %86 = vector.broadcast %cst_33 : f32 to vector<2x32xf32>
    %87 = arith.mulf %86, %85 : vector<2x32xf32>
    %cst_34 = arith.constant 5.000000e-01 : f32
    %88 = vector.broadcast %cst_34 : f32 to vector<2x32xf32>
    %89 = arith.addf %87, %88 : vector<2x32xf32>
    %90 = arith.mulf %83, %62 : vector<2x32xf32>
    %91 = arith.mulf %78, %84 : vector<2x32xf32>
    %92 = arith.addf %90, %91 : vector<2x32xf32>
    %93 = math.tanh %92 : vector<2x32xf32>
    %94 = arith.mulf %89, %93 : vector<2x32xf32>
    %c4 = arith.constant 4 : index
    %c0_35 = arith.constant 0 : index
    %95 = vector.load %arg7[%c4, %c0_35] : memref<16x32xf32, #tpu.memory_space<vmem>>, vector<2x32xf32>
    tpu.vector_store %arg7[%c4, %c0_35], %94 {strides = array<i32>} : memref<16x32xf32, #tpu.memory_space<vmem>>, vector<2x32xf32>,
    %96 = vector.extract_strided_slice %0 {offsets = [0, 12], sizes = [2, 4], strides = [1, 1]} : vector<2x32xf32> to vector<2x4xf32>
    %cst_36 = arith.constant dense<0.000000e+00> : vector<2x128xf32>
    %97 = tpu.matmul %96, %1, %cst_36 {dimension_numbers = #tpu.dot_dimension_numbers<[1], [0], [0], [1], [0, 0, 1, 1], [], []>} : vector<2x4xf32>, vector<4x128xf32>, vector<2x128xf32> -> vector<2x128xf32>
    %98 = vector.broadcast %3 : vector<1x128xf32> to vector<2x128xf32>
    %99 = arith.addf %97, %98 : vector<2x128xf32>
    %100 = arith.truncf %94 : vector<2x32xf32> to vector<2x32xbf16>
    %cst_37 = arith.constant dense<0.000000e+00> : vector<2x128xf32>
    %101 = tpu.matmul %100, %2, %cst_37 {dimension_numbers = #tpu.dot_dimension_numbers<[1], [0], [0], [1], [0, 0, 1, 1], [], []>} : vector<2x32xbf16>, vector<32x128xbf16>, vector<2x128xf32> -> vector<2x128xf32>
    %102 = arith.addf %99, %101 : vector<2x128xf32>
    %103 = math.tanh %102 : vector<2x128xf32>
    %104 = vector.extract_strided_slice %103 {offsets = [0, 0], sizes = [2, 32], strides = [1, 1]} : vector<2x128xf32> to vector<2x32xf32>
    %cst_38 = arith.constant 5.000000e-01 : f32
    %105 = vector.broadcast %cst_38 : f32 to vector<2x32xf32>
    %106 = arith.mulf %105, %104 : vector<2x32xf32>
    %cst_39 = arith.constant 5.000000e-01 : f32
    %107 = vector.broadcast %cst_39 : f32 to vector<2x32xf32>
    %108 = arith.addf %106, %107 : vector<2x32xf32>
    %109 = vector.extract_strided_slice %103 {offsets = [0, 32], sizes = [2, 32], strides = [1, 1]} : vector<2x128xf32> to vector<2x32xf32>
    %cst_40 = arith.constant 5.000000e-01 : f32
    %110 = vector.broadcast %cst_40 : f32 to vector<2x32xf32>
    %111 = arith.mulf %110, %109 : vector<2x32xf32>
    %cst_41 = arith.constant 5.000000e-01 : f32
    %112 = vector.broadcast %cst_41 : f32 to vector<2x32xf32>
    %113 = arith.addf %111, %112 : vector<2x32xf32>
    %114 = vector.extract_strided_slice %103 {offsets = [0, 64], sizes = [2, 32], strides = [1, 1]} : vector<2x128xf32> to vector<2x32xf32>
    %115 = vector.extract_strided_slice %103 {offsets = [0, 96], sizes = [2, 32], strides = [1, 1]} : vector<2x128xf32> to vector<2x32xf32>
    %cst_42 = arith.constant 5.000000e-01 : f32
    %116 = vector.broadcast %cst_42 : f32 to vector<2x32xf32>
    %117 = arith.mulf %116, %115 : vector<2x32xf32>
    %cst_43 = arith.constant 5.000000e-01 : f32
    %118 = vector.broadcast %cst_43 : f32 to vector<2x32xf32>
    %119 = arith.addf %117, %118 : vector<2x32xf32>
    %120 = arith.mulf %113, %92 : vector<2x32xf32>
    %121 = arith.mulf %108, %114 : vector<2x32xf32>
    %122 = arith.addf %120, %121 : vector<2x32xf32>
    %123 = math.tanh %122 : vector<2x32xf32>
    %124 = arith.mulf %119, %123 : vector<2x32xf32>
    %c6 = arith.constant 6 : index
    %c0_44 = arith.constant 0 : index
    %125 = vector.load %arg7[%c6, %c0_44] : memref<16x32xf32, #tpu.memory_space<vmem>>, vector<2x32xf32>
    tpu.vector_store %arg7[%c6, %c0_44], %124 {strides = array<i32>} : memref<16x32xf32, #tpu.memory_space<vmem>>, vector<2x32xf32>,
    %126 = vector.extract_strided_slice %0 {offsets = [0, 16], sizes = [2, 4], strides = [1, 1]} : vector<2x32xf32> to vector<2x4xf32>
    %cst_45 = arith.constant dense<0.000000e+00> : vector<2x128xf32>
    %127 = tpu.matmul %126, %1, %cst_45 {dimension_numbers = #tpu.dot_dimension_numbers<[1], [0], [0], [1], [0, 0, 1, 1], [], []>} : vector<2x4xf32>, vector<4x128xf32>, vector<2x128xf32> -> vector<2x128xf32>
    %128 = vector.broadcast %3 : vector<1x128xf32> to vector<2x128xf32>
    %129 = arith.addf %127, %128 : vector<2x128xf32>
    %130 = arith.truncf %124 : vector<2x32xf32> to vector<2x32xbf16>
    %cst_46 = arith.constant dense<0.000000e+00> : vector<2x128xf32>
    %131 = tpu.matmul %130, %2, %cst_46 {dimension_numbers = #tpu.dot_dimension_numbers<[1], [0], [0], [1], [0, 0, 1, 1], [], []>} : vector<2x32xbf16>, vector<32x128xbf16>, vector<2x128xf32> -> vector<2x128xf32>
    %132 = arith.addf %129, %131 : vector<2x128xf32>
    %133 = math.tanh %132 : vector<2x128xf32>
    %134 = vector.extract_strided_slice %133 {offsets = [0, 0], sizes = [2, 32], strides = [1, 1]} : vector<2x128xf32> to vector<2x32xf32>
    %cst_47 = arith.constant 5.000000e-01 : f32
    %135 = vector.broadcast %cst_47 : f32 to vector<2x32xf32>
    %136 = arith.mulf %135, %134 : vector<2x32xf32>
    %cst_48 = arith.constant 5.000000e-01 : f32
    %137 = vector.broadcast %cst_48 : f32 to vector<2x32xf32>
    %138 = arith.addf %136, %137 : vector<2x32xf32>
    %139 = vector.extract_strided_slice %133 {offsets = [0, 32], sizes = [2, 32], strides = [1, 1]} : vector<2x128xf32> to vector<2x32xf32>
    %cst_49 = arith.constant 5.000000e-01 : f32
    %140 = vector.broadcast %cst_49 : f32 to vector<2x32xf32>
    %141 = arith.mulf %140, %139 : vector<2x32xf32>
    %cst_50 = arith.constant 5.000000e-01 : f32
    %142 = vector.broadcast %cst_50 : f32 to vector<2x32xf32>
    %143 = arith.addf %141, %142 : vector<2x32xf32>
    %144 = vector.extract_strided_slice %133 {offsets = [0, 64], sizes = [2, 32], strides = [1, 1]} : vector<2x128xf32> to vector<2x32xf32>
    %145 = vector.extract_strided_slice %133 {offsets = [0, 96], sizes = [2, 32], strides = [1, 1]} : vector<2x128xf32> to vector<2x32xf32>
    %cst_51 = arith.constant 5.000000e-01 : f32
    %146 = vector.broadcast %cst_51 : f32 to vector<2x32xf32>
    %147 = arith.mulf %146, %145 : vector<2x32xf32>
    %cst_52 = arith.constant 5.000000e-01 : f32
    %148 = vector.broadcast %cst_52 : f32 to vector<2x32xf32>
    %149 = arith.addf %147, %148 : vector<2x32xf32>
    %150 = arith.mulf %143, %122 : vector<2x32xf32>
    %151 = arith.mulf %138, %144 : vector<2x32xf32>
    %152 = arith.addf %150, %151 : vector<2x32xf32>
    %153 = math.tanh %152 : vector<2x32xf32>
    %154 = arith.mulf %149, %153 : vector<2x32xf32>
    %c8 = arith.constant 8 : index
    %c0_53 = arith.constant 0 : index
    %155 = vector.load %arg7[%c8, %c0_53] : memref<16x32xf32, #tpu.memory_space<vmem>>, vector<2x32xf32>
    tpu.vector_store %arg7[%c8, %c0_53], %154 {strides = array<i32>} : memref<16x32xf32, #tpu.memory_space<vmem>>, vector<2x32xf32>,
    %156 = vector.extract_strided_slice %0 {offsets = [0, 20], sizes = [2, 4], strides = [1, 1]} : vector<2x32xf32> to vector<2x4xf32>
    %cst_54 = arith.constant dense<0.000000e+00> : vector<2x128xf32>
    %157 = tpu.matmul %156, %1, %cst_54 {dimension_numbers = #tpu.dot_dimension_numbers<[1], [0], [0], [1], [0, 0, 1, 1], [], []>} : vector<2x4xf32>, vector<4x128xf32>, vector<2x128xf32> -> vector<2x128xf32>
    %158 = vector.broadcast %3 : vector<1x128xf32> to vector<2x128xf32>
    %159 = arith.addf %157, %158 : vector<2x128xf32>
    %160 = arith.truncf %154 : vector<2x32xf32> to vector<2x32xbf16>
    %cst_55 = arith.constant dense<0.000000e+00> : vector<2x128xf32>
    %161 = tpu.matmul %160, %2, %cst_55 {dimension_numbers = #tpu.dot_dimension_numbers<[1], [0], [0], [1], [0, 0, 1, 1], [], []>} : vector<2x32xbf16>, vector<32x128xbf16>, vector<2x128xf32> -> vector<2x128xf32>
    %162 = arith.addf %159, %161 : vector<2x128xf32>
    %163 = math.tanh %162 : vector<2x128xf32>
    %164 = vector.extract_strided_slice %163 {offsets = [0, 0], sizes = [2, 32], strides = [1, 1]} : vector<2x128xf32> to vector<2x32xf32>
    %cst_56 = arith.constant 5.000000e-01 : f32
    %165 = vector.broadcast %cst_56 : f32 to vector<2x32xf32>
    %166 = arith.mulf %165, %164 : vector<2x32xf32>
    %cst_57 = arith.constant 5.000000e-01 : f32
    %167 = vector.broadcast %cst_57 : f32 to vector<2x32xf32>
    %168 = arith.addf %166, %167 : vector<2x32xf32>
    %169 = vector.extract_strided_slice %163 {offsets = [0, 32], sizes = [2, 32], strides = [1, 1]} : vector<2x128xf32> to vector<2x32xf32>
    %cst_58 = arith.constant 5.000000e-01 : f32
    %170 = vector.broadcast %cst_58 : f32 to vector<2x32xf32>
    %171 = arith.mulf %170, %169 : vector<2x32xf32>
    %cst_59 = arith.constant 5.000000e-01 : f32
    %172 = vector.broadcast %cst_59 : f32 to vector<2x32xf32>
    %173 = arith.addf %171, %172 : vector<2x32xf32>
    %174 = vector.extract_strided_slice %163 {offsets = [0, 64], sizes = [2, 32], strides = [1, 1]} : vector<2x128xf32> to vector<2x32xf32>
    %175 = vector.extract_strided_slice %163 {offsets = [0, 96], sizes = [2, 32], strides = [1, 1]} : vector<2x128xf32> to vector<2x32xf32>
    %cst_60 = arith.constant 5.000000e-01 : f32
    %176 = vector.broadcast %cst_60 : f32 to vector<2x32xf32>
    %177 = arith.mulf %176, %175 : vector<2x32xf32>
    %cst_61 = arith.constant 5.000000e-01 : f32
    %178 = vector.broadcast %cst_61 : f32 to vector<2x32xf32>
    %179 = arith.addf %177, %178 : vector<2x32xf32>
    %180 = arith.mulf %173, %152 : vector<2x32xf32>
    %181 = arith.mulf %168, %174 : vector<2x32xf32>
    %182 = arith.addf %180, %181 : vector<2x32xf32>
    %183 = math.tanh %182 : vector<2x32xf32>
    %184 = arith.mulf %179, %183 : vector<2x32xf32>
    %c10 = arith.constant 10 : index
    %c0_62 = arith.constant 0 : index
    %185 = vector.load %arg7[%c10, %c0_62] : memref<16x32xf32, #tpu.memory_space<vmem>>, vector<2x32xf32>
    tpu.vector_store %arg7[%c10, %c0_62], %184 {strides = array<i32>} : memref<16x32xf32, #tpu.memory_space<vmem>>, vector<2x32xf32>,
    %186 = vector.extract_strided_slice %0 {offsets = [0, 24], sizes = [2, 4], strides = [1, 1]} : vector<2x32xf32> to vector<2x4xf32>
    %cst_63 = arith.constant dense<0.000000e+00> : vector<2x128xf32>
    %187 = tpu.matmul %186, %1, %cst_63 {dimension_numbers = #tpu.dot_dimension_numbers<[1], [0], [0], [1], [0, 0, 1, 1], [], []>} : vector<2x4xf32>, vector<4x128xf32>, vector<2x128xf32> -> vector<2x128xf32>
    %188 = vector.broadcast %3 : vector<1x128xf32> to vector<2x128xf32>
    %189 = arith.addf %187, %188 : vector<2x128xf32>
    %190 = arith.truncf %184 : vector<2x32xf32> to vector<2x32xbf16>
    %cst_64 = arith.constant dense<0.000000e+00> : vector<2x128xf32>
    %191 = tpu.matmul %190, %2, %cst_64 {dimension_numbers = #tpu.dot_dimension_numbers<[1], [0], [0], [1], [0, 0, 1, 1], [], []>} : vector<2x32xbf16>, vector<32x128xbf16>, vector<2x128xf32> -> vector<2x128xf32>
    %192 = arith.addf %189, %191 : vector<2x128xf32>
    %193 = math.tanh %192 : vector<2x128xf32>
    %194 = vector.extract_strided_slice %193 {offsets = [0, 0], sizes = [2, 32], strides = [1, 1]} : vector<2x128xf32> to vector<2x32xf32>
    %cst_65 = arith.constant 5.000000e-01 : f32
    %195 = vector.broadcast %cst_65 : f32 to vector<2x32xf32>
    %196 = arith.mulf %195, %194 : vector<2x32xf32>
    %cst_66 = arith.constant 5.000000e-01 : f32
    %197 = vector.broadcast %cst_66 : f32 to vector<2x32xf32>
    %198 = arith.addf %196, %197 : vector<2x32xf32>
    %199 = vector.extract_strided_slice %193 {offsets = [0, 32], sizes = [2, 32], strides = [1, 1]} : vector<2x128xf32> to vector<2x32xf32>
    %cst_67 = arith.constant 5.000000e-01 : f32
    %200 = vector.broadcast %cst_67 : f32 to vector<2x32xf32>
    %201 = arith.mulf %200, %199 : vector<2x32xf32>
    %cst_68 = arith.constant 5.000000e-01 : f32
    %202 = vector.broadcast %cst_68 : f32 to vector<2x32xf32>
    %203 = arith.addf %201, %202 : vector<2x32xf32>
    %204 = vector.extract_strided_slice %193 {offsets = [0, 64], sizes = [2, 32], strides = [1, 1]} : vector<2x128xf32> to vector<2x32xf32>
    %205 = vector.extract_strided_slice %193 {offsets = [0, 96], sizes = [2, 32], strides = [1, 1]} : vector<2x128xf32> to vector<2x32xf32>
    %cst_69 = arith.constant 5.000000e-01 : f32
    %206 = vector.broadcast %cst_69 : f32 to vector<2x32xf32>
    %207 = arith.mulf %206, %205 : vector<2x32xf32>
    %cst_70 = arith.constant 5.000000e-01 : f32
    %208 = vector.broadcast %cst_70 : f32 to vector<2x32xf32>
    %209 = arith.addf %207, %208 : vector<2x32xf32>
    %210 = arith.mulf %203, %182 : vector<2x32xf32>
    %211 = arith.mulf %198, %204 : vector<2x32xf32>
    %212 = arith.addf %210, %211 : vector<2x32xf32>
    %213 = math.tanh %212 : vector<2x32xf32>
    %214 = arith.mulf %209, %213 : vector<2x32xf32>
    %c12 = arith.constant 12 : index
    %c0_71 = arith.constant 0 : index
    %215 = vector.load %arg7[%c12, %c0_71] : memref<16x32xf32, #tpu.memory_space<vmem>>, vector<2x32xf32>
    tpu.vector_store %arg7[%c12, %c0_71], %214 {strides = array<i32>} : memref<16x32xf32, #tpu.memory_space<vmem>>, vector<2x32xf32>,
    %216 = vector.extract_strided_slice %0 {offsets = [0, 28], sizes = [2, 4], strides = [1, 1]} : vector<2x32xf32> to vector<2x4xf32>
    %cst_72 = arith.constant dense<0.000000e+00> : vector<2x128xf32>
    %217 = tpu.matmul %216, %1, %cst_72 {dimension_numbers = #tpu.dot_dimension_numbers<[1], [0], [0], [1], [0, 0, 1, 1], [], []>} : vector<2x4xf32>, vector<4x128xf32>, vector<2x128xf32> -> vector<2x128xf32>
    %218 = vector.broadcast %3 : vector<1x128xf32> to vector<2x128xf32>
    %219 = arith.addf %217, %218 : vector<2x128xf32>
    %220 = arith.truncf %214 : vector<2x32xf32> to vector<2x32xbf16>
    %cst_73 = arith.constant dense<0.000000e+00> : vector<2x128xf32>
    %221 = tpu.matmul %220, %2, %cst_73 {dimension_numbers = #tpu.dot_dimension_numbers<[1], [0], [0], [1], [0, 0, 1, 1], [], []>} : vector<2x32xbf16>, vector<32x128xbf16>, vector<2x128xf32> -> vector<2x128xf32>
    %222 = arith.addf %219, %221 : vector<2x128xf32>
    %223 = math.tanh %222 : vector<2x128xf32>
    %224 = vector.extract_strided_slice %223 {offsets = [0, 0], sizes = [2, 32], strides = [1, 1]} : vector<2x128xf32> to vector<2x32xf32>
    %cst_74 = arith.constant 5.000000e-01 : f32
    %225 = vector.broadcast %cst_74 : f32 to vector<2x32xf32>
    %226 = arith.mulf %225, %224 : vector<2x32xf32>
    %cst_75 = arith.constant 5.000000e-01 : f32
    %227 = vector.broadcast %cst_75 : f32 to vector<2x32xf32>
    %228 = arith.addf %226, %227 : vector<2x32xf32>
    %229 = vector.extract_strided_slice %223 {offsets = [0, 32], sizes = [2, 32], strides = [1, 1]} : vector<2x128xf32> to vector<2x32xf32>
    %cst_76 = arith.constant 5.000000e-01 : f32
    %230 = vector.broadcast %cst_76 : f32 to vector<2x32xf32>
    %231 = arith.mulf %230, %229 : vector<2x32xf32>
    %cst_77 = arith.constant 5.000000e-01 : f32
    %232 = vector.broadcast %cst_77 : f32 to vector<2x32xf32>
    %233 = arith.addf %231, %232 : vector<2x32xf32>
    %234 = vector.extract_strided_slice %223 {offsets = [0, 64], sizes = [2, 32], strides = [1, 1]} : vector<2x128xf32> to vector<2x32xf32>
    %235 = vector.extract_strided_slice %223 {offsets = [0, 96], sizes = [2, 32], strides = [1, 1]} : vector<2x128xf32> to vector<2x32xf32>
    %cst_78 = arith.constant 5.000000e-01 : f32
    %236 = vector.broadcast %cst_78 : f32 to vector<2x32xf32>
    %237 = arith.mulf %236, %235 : vector<2x32xf32>
    %cst_79 = arith.constant 5.000000e-01 : f32
    %238 = vector.broadcast %cst_79 : f32 to vector<2x32xf32>
    %239 = arith.addf %237, %238 : vector<2x32xf32>
    %240 = arith.mulf %233, %212 : vector<2x32xf32>
    %241 = arith.mulf %228, %234 : vector<2x32xf32>
    %242 = arith.addf %240, %241 : vector<2x32xf32>
    %243 = math.tanh %242 : vector<2x32xf32>
    %244 = arith.mulf %239, %243 : vector<2x32xf32>
    %c14 = arith.constant 14 : index
    %c0_80 = arith.constant 0 : index
    %245 = vector.load %arg7[%c14, %c0_80] : memref<16x32xf32, #tpu.memory_space<vmem>>, vector<2x32xf32>
    tpu.vector_store %arg7[%c14, %c0_80], %244 {strides = array<i32>} : memref<16x32xf32, #tpu.memory_space<vmem>>, vector<2x32xf32>,
    %c0_81 = arith.constant 0 : index
    %c0_82 = arith.constant 0 : index
    %246 = vector.load %arg7[%c0_81, %c0_82] : memref<16x32xf32, #tpu.memory_space<vmem>>, vector<16x32xf32>
    %c0_83 = arith.constant 0 : index
    %c0_84 = arith.constant 0 : index
    %247 = vector.load %arg4[%c0_83, %c0_84] : memref<32x1xf32, #tpu.memory_space<vmem>>, vector<32x1xf32>
    %cst_85 = arith.constant dense<0.000000e+00> : vector<16x1xf32>
    %248 = tpu.matmul %246, %247, %cst_85 {dimension_numbers = #tpu.dot_dimension_numbers<[1], [0], [0], [1], [0, 0, 1, 1], [], []>} : vector<16x32xf32>, vector<32x1xf32>, vector<16x1xf32> -> vector<16x1xf32>
    %c0_86 = arith.constant 0 : index
    %c0_87 = arith.constant 0 : index
    %249 = vector.load %arg5[%c0_86, %c0_87] : memref<1x1xf32, #tpu.memory_space<vmem>>, vector<1x1xf32>
    %250 = vector.broadcast %249 : vector<1x1xf32> to vector<16x1xf32>
    %251 = arith.addf %248, %250 : vector<16x1xf32>
    %c0_88 = arith.constant 0 : index
    %c0_89 = arith.constant 0 : index
    %252 = vector.load %arg6[%c0_88, %c0_89] : memref<16x1xf32, #tpu.memory_space<vmem>>, vector<16x1xf32>
    tpu.vector_store %arg6[%c0_88, %c0_89], %251 {strides = array<i32>} : memref<16x1xf32, #tpu.memory_space<vmem>>, vector<16x1xf32>,
    return
  }
}

</mosaic_0001>

<llo_original>
// kernel: lstm_wrapper_single_output.1
$region0: #{lstm_wrapper_single_output.1}
  #allocation0 [shape = 'u32[]', space=smem, size = 0x4, offset = 0x4, fixed_abs, tag = 'smem constant byte address 0x4 - core index']
  #allocation1 [shape = 'u32[144,128]{1,0:T(1,128)}', space=vmem, size = 0x12000, scoped, tag = 'internal scratch']
  #allocation2 [shape = 'f32[16,32]{1,0:T(8,128)}', space=vmem, size = 0x2000, scoped, tag = 'scratch operand']
  #allocation3 [shape = 'f32[1,1]{1,0:T(1,128)S(1)}', space=vmem, size = 0x200, scoped, tag = 'scoped memory for lstm_wrapper_single_output.1']
  %s0 = inlined_call_operand.vmem [shape: f32[2,32], index: 0, kind: input, shape index: {}]
  %s1 = inlined_call_operand.vmem [shape: f32[4,128], index: 1, kind: input, shape index: {}]
  %s2 = inlined_call_operand.vmem [shape: bf16[32,128], index: 2, kind: input, shape index: {}]
  %s3 = inlined_call_operand.vmem [shape: f32[1,128], index: 3, kind: input, shape index: {}]
  %s4 = inlined_call_operand.vmem [shape: f32[32,1], index: 4, kind: input, shape index: {}]
  %s5 = inlined_call_operand.<no memory space> [shape: f32[1,1], index: 5, kind: input, shape index: {}]
  %s6 = inlined_call_operand.vmem [shape: f32[16,1], index: 6, kind: output, shape index: {}]
  %s7 = sld [smem:[#allocation0]]
  $region34: #{lstm_wrapper_single_output.1} parent=0
    _
  %s9 = ssub.s32 1, %s7
  %s10 = scalar_select 0, %s9, %s7
  %v11 = vstv %s5
  %12 = vst [vmem:[#allocation3] sm:$0x1] %v11
  // Predicated region
  $region2: #{lstm_wrapper_single_output.1} parent=0 // pred_check
    _
  $region3: #{lstm_wrapper_single_output.1} parent=0 // pred_check_branch
    %14 = sbr.rel (0) target = $region5
  $region4: #{lstm_wrapper_single_output.1} parent=0 // pred_region
    _
  $region5: #{lstm_wrapper_single_output.1} parent=0 // pred_fallthru
    _
  // Predicated region
  $region6: #{lstm_wrapper_single_output.1} parent=0 // pred_check
    _
  $region7: #{lstm_wrapper_single_output.1} parent=0 // pred_check_branch
    %16 = sbr.rel (0) target = $region9
  $region8: #{lstm_wrapper_single_output.1} parent=0 // pred_region
    _
  $region9: #{lstm_wrapper_single_output.1} parent=0 // pred_fallthru
    _
  // Predicated region
  $region10: #{lstm_wrapper_single_output.1} parent=0 // pred_check
    _
  $region11: #{lstm_wrapper_single_output.1} parent=0 // pred_check_branch
    %18 = sbr.rel (0) target = $region13
  $region12: #{lstm_wrapper_single_output.1} parent=0 // pred_region
    _
  $region13: #{lstm_wrapper_single_output.1} parent=0 // pred_fallthru
    _
  // Predicated region
  $region14: #{lstm_wrapper_single_output.1} parent=0 // pred_check
    _
  $region15: #{lstm_wrapper_single_output.1} parent=0 // pred_check_branch
    %20 = sbr.rel (0) target = $region17
  $region16: #{lstm_wrapper_single_output.1} parent=0 // pred_region
    _
  $region17: #{lstm_wrapper_single_output.1} parent=0 // pred_fallthru
    _
  // Predicated region
  $region18: #{lstm_wrapper_single_output.1} parent=0 // pred_check
    _
  $region19: #{lstm_wrapper_single_output.1} parent=0 // pred_check_branch
    %22 = sbr.rel (0) target = $region21
  $region20: #{lstm_wrapper_single_output.1} parent=0 // pred_region
    _
  $region21: #{lstm_wrapper_single_output.1} parent=0 // pred_fallthru
    _
  // Predicated region
  $region22: #{lstm_wrapper_single_output.1} parent=0 // pred_check
    _
  $region23: #{lstm_wrapper_single_output.1} parent=0 // pred_check_branch
    %24 = sbr.rel (0) target = $region25
  $region24: #{lstm_wrapper_single_output.1} parent=0 // pred_region
    _
  $region25: #{lstm_wrapper_single_output.1} parent=0 // pred_fallthru
    _
  %v26 = vld [vmem:[%s0] sm:$0x3]
  %v27 = vld [vmem:[%s1] sm:$0xf]
  %v28 = vld [vmem:[%s2] sm:$0xf]
  %v29 = vld [vmem:[%s2 + $0x4] sm:$0xf]
  %v30 = vld [vmem:[%s2 + $0x8] sm:$0xf]
  %v31 = vld [vmem:[%s2 + $0xc] sm:$0xf]
  %v32 = vld [vmem:[%s3] sm:$0x1]
  %v34 = vlaneseq
  %v35 = vshrl.u32 %v34, 7
  %v36 = vsub.s32 0, %v35
  %v37 = vrot.slane %v32, %v36
  %vm39 = vcmask 31744
  %v41 = vsel %vm39, %v26, 0
  %vm43 = vcmask 1043456
  %v45 = vsel %vm43, %v27, 0
  %47 = vmatprep.subr.mxu0 0.0
  %48 = vmatpush1.msra.mxu0 %v45
  %49 = vmatprep.subr.mxu0 0.0
  %50 = vmatpush1.msra.mxu0 0.0
  %51 = vmatprep.subr.mxu0 0.0
  %52 = vmatpush1.msra.mxu0 0.0
  %53 = vmatprep.subr.mxu0 0.0
  %54 = vmatpush1.msra.mxu0 0.0
  %55 = vmatprep.subr.mxu0 0.0
  %56 = vmatpush1.msra.mxu0 0.0
  %57 = vmatprep.subr.mxu0 0.0
  %58 = vmatpush1.msra.mxu0 0.0
  %59 = vmatprep.subr.mxu0 0.0
  %60 = vmatpush1.msra.mxu0 0.0
  %61 = vmatprep.subr.mxu0 0.0
  %62 = vmatpush1.msra.mxu0 0.0
  %63 = vmatprep.subr.mxu0 0.0
  %64 = vmatpush1.msra.mxu0 0.0
  %65 = vmatprep.subr.mxu0 0.0
  %66 = vmatpush1.msra.mxu0 0.0
  %67 = vmatprep.subr.mxu0 0.0
  %68 = vmatpush1.msra.mxu0 0.0
  %69 = vmatprep.subr.mxu0 0.0
  %70 = vmatpush1.msra.mxu0 0.0
  %71 = vmatprep.subr.mxu0 0.0
  %72 = vmatpush1.msra.mxu0 0.0
  %73 = vmatprep.subr.mxu0 0.0
  %74 = vmatpush1.msra.mxu0 0.0
  %75 = vmatprep.subr.mxu0 0.0
  %76 = vmatpush1.msra.mxu0 0.0
  %77 = vmatprep.subr.mxu0 0.0
  %78 = vmatpush1.msra.mxu0 0.0
  %79 = vmatprep.subr.mxu0 0.0
  %80 = vmatpush1.msra.mxu0 0.0
  %81 = vmatprep.subr.mxu0 0.0
  %82 = vmatpush1.msra.mxu0 0.0
  %83 = vmatprep.subr.mxu0 0.0
  %84 = vmatpush1.msra.mxu0 0.0
  %85 = vmatprep.subr.mxu0 0.0
  %86 = vmatpush1.msra.mxu0 0.0
  %87 = vmatprep.subr.mxu0 0.0
  %88 = vmatpush1.msra.mxu0 0.0
  %89 = vmatprep.subr.mxu0 0.0
  %90 = vmatpush1.msra.mxu0 0.0
  %91 = vmatprep.subr.mxu0 0.0
  %92 = vmatpush1.msra.mxu0 0.0
  %93 = vmatprep.subr.mxu0 0.0
  %94 = vmatpush1.msra.mxu0 0.0
  %95 = vmatprep.subr.mxu0 0.0
  %96 = vmatpush1.msra.mxu0 0.0
  %97 = vmatprep.subr.mxu0 0.0
  %98 = vmatpush1.msra.mxu0 0.0
  %99 = vmatprep.subr.mxu0 0.0
  %100 = vmatpush1.msra.mxu0 0.0
  %101 = vmatprep.subr.mxu0 0.0
  %102 = vmatpush1.msra.mxu0 0.0
  %103 = vmatprep.subr.mxu0 0.0
  %104 = vmatpush1.msra.mxu0 0.0
  %105 = vmatprep.subr.mxu0 0.0
  %106 = vmatpush1.msra.mxu0 0.0
  %107 = vmatprep.subr.mxu0 0.0
  %108 = vmatpush1.msra.mxu0 0.0
  %109 = vmatprep.subr.mxu0 0.0
  %110 = vmatpush1.msra.mxu0 0.0
  %111 = vmatprep.mubr.f32.mxu0 0.0
  %112 = vmatmul.mubr.f32.gmra.mrb[0].mxu0 %v41
  %v113 = vpop.f32.mrb[0].mxu0
  %v114 = vadd.f32 %v37, %v113
  %v115 = vpop.f32.mrb[0].mxu0
  %116 = vdwg.mxu0
  %v121 = vunpack.c.l.b16 %v28
  %v122 = vunpack.c.l.b16 %v29
  %v123 = vunpack.c.l.b16 %v30
  %v124 = vunpack.c.l.b16 %v31
  %v125 = vpack.c.b16 %v122, %v121
  %v126 = vpack.c.b16 %v124, %v123
  %vm129 = vcmask 261120
  %v131 = vsel %vm129, 0, 0
  %133 = vmatprep.subr.bf16.mxu0 0
  %134 = vmatpush1.bf16.msra.mxu0 %v125
  %135 = vmatprep.subr.bf16.mxu0 0
  %136 = vmatpush1.bf16.msra.mxu0 %v126
  %137 = vmatprep.subr.bf16.mxu0 0
  %138 = vmatpush1.bf16.msra.mxu0 0
  %139 = vmatprep.subr.bf16.mxu0 0
  %140 = vmatpush1.bf16.msra.mxu0 0
  %141 = vmatprep.subr.bf16.mxu0 0
  %142 = vmatpush1.bf16.msra.mxu0 0
  %143 = vmatprep.subr.bf16.mxu0 0
  %144 = vmatpush1.bf16.msra.mxu0 0
  %145 = vmatprep.subr.bf16.mxu0 0
  %146 = vmatpush1.bf16.msra.mxu0 0
  %147 = vmatprep.subr.bf16.mxu0 0
  %148 = vmatpush1.bf16.msra.mxu0 0
  %149 = vmatprep.subr.bf16.mxu0 0
  %150 = vmatpush1.bf16.msra.mxu0 0
  %151 = vmatprep.subr.bf16.mxu0 0
  %152 = vmatpush1.bf16.msra.mxu0 0
  %153 = vmatprep.subr.bf16.mxu0 0
  %154 = vmatpush1.bf16.msra.mxu0 0
  %155 = vmatprep.subr.bf16.mxu0 0
  %156 = vmatpush1.bf16.msra.mxu0 0
  %157 = vmatprep.subr.bf16.mxu0 0
  %158 = vmatpush1.bf16.msra.mxu0 0
  %159 = vmatprep.subr.bf16.mxu0 0
  %160 = vmatpush1.bf16.msra.mxu0 0
  %161 = vmatprep.subr.bf16.mxu0 0
  %162 = vmatpush1.bf16.msra.mxu0 0
  %163 = vmatprep.subr.bf16.mxu0 0
  %164 = vmatpush1.bf16.msra.mxu0 0
  %165 = vmatprep.mubr.bf16.mxu0 0
  %166 = vmatmul.mubr.bf16.gmra.mrb[0].mxu0 %v131
  %v167 = vpop.f32.mrb[0].mxu0
  %v168 = vadd.f32 0.0, %v167
  %v169 = vpop.f32.mrb[0].mxu0
  %v170 = vpop.f32.mrb[0].mxu0
  %v171 = vpop.f32.mrb[0].mxu0
  %172 = vdwg.mxu0
  %v173 = vadd.f32 %v114, %v168
  %v174 = vtanh.pop %v173
  %v175 = vmul.f32 %v174, 0.5
  %v176 = vadd.f32 %v175, 0.5
  %v177 = vmul.f32 %v176, 0.0
  %179 = vrot.lane.b32.xlu0 %v174, 64
  %v180 = vpop.permute.xlu0 %179
  %v182 = vmul.f32 %v176, %v180
  %184 = vrot.lane.b32.xlu0 %v182, 32
  %v185 = vpop.permute.xlu0 %184
  %v187 = vadd.f32 %v177, %v185
  %v188 = vtanh.pop %v187
  %190 = vrot.lane.b32.xlu0 %v188, 64
  %v191 = vpop.permute.xlu0 %190
  %v193 = vmul.f32 %v176, %v191
  %195 = vrot.lane.b32.xlu0 %v193, 32
  %v196 = vpop.permute.xlu0 %195
  %vm198 = vcmask 254976
  %199 = vst.msk [vmem:[#allocation2] sm:$0x3] %vm198, %v196
  %200 = vrot.lane.b32.xlu0 %v26, 124
  %v201 = vpop.permute.xlu0 %200
  %v202 = vsel %vm39, %v201, 0
  %204 = vmatprep.subr.mxu0 0.0
  %205 = vmatpush1.msra.mxu0 %v45
  %206 = vmatprep.subr.mxu0 0.0
  %207 = vmatpush1.msra.mxu0 0.0
  %208 = vmatprep.subr.mxu0 0.0
  %209 = vmatpush1.msra.mxu0 0.0
  %210 = vmatprep.subr.mxu0 0.0
  %211 = vmatpush1.msra.mxu0 0.0
  %212 = vmatprep.subr.mxu0 0.0
  %213 = vmatpush1.msra.mxu0 0.0
  %214 = vmatprep.subr.mxu0 0.0
  %215 = vmatpush1.msra.mxu0 0.0
  %216 = vmatprep.subr.mxu0 0.0
  %217 = vmatpush1.msra.mxu0 0.0
  %218 = vmatprep.subr.mxu0 0.0
  %219 = vmatpush1.msra.mxu0 0.0
  %220 = vmatprep.subr.mxu0 0.0
  %221 = vmatpush1.msra.mxu0 0.0
  %222 = vmatprep.subr.mxu0 0.0
  %223 = vmatpush1.msra.mxu0 0.0
  %224 = vmatprep.subr.mxu0 0.0
  %225 = vmatpush1.msra.mxu0 0.0
  %226 = vmatprep.subr.mxu0 0.0
  %227 = vmatpush1.msra.mxu0 0.0
  %228 = vmatprep.subr.mxu0 0.0
  %229 = vmatpush1.msra.mxu0 0.0
  %230 = vmatprep.subr.mxu0 0.0
  %231 = vmatpush1.msra.mxu0 0.0
  %232 = vmatprep.subr.mxu0 0.0
  %233 = vmatpush1.msra.mxu0 0.0
  %234 = vmatprep.subr.mxu0 0.0
  %235 = vmatpush1.msra.mxu0 0.0
  %236 = vmatprep.subr.mxu0 0.0
  %237 = vmatpush1.msra.mxu0 0.0
  %238 = vmatprep.subr.mxu0 0.0
  %239 = vmatpush1.msra.mxu0 0.0
  %240 = vmatprep.subr.mxu0 0.0
  %241 = vmatpush1.msra.mxu0 0.0
  %242 = vmatprep.subr.mxu0 0.0
  %243 = vmatpush1.msra.mxu0 0.0
  %244 = vmatprep.subr.mxu0 0.0
  %245 = vmatpush1.msra.mxu0 0.0
  %246 = vmatprep.subr.mxu0 0.0
  %247 = vmatpush1.msra.mxu0 0.0
  %248 = vmatprep.subr.mxu0 0.0
  %249 = vmatpush1.msra.mxu0 0.0
  %250 = vmatprep.subr.mxu0 0.0
  %251 = vmatpush1.msra.mxu0 0.0
  %252 = vmatprep.subr.mxu0 0.0
  %253 = vmatpush1.msra.mxu0 0.0
  %254 = vmatprep.subr.mxu0 0.0
  %255 = vmatpush1.msra.mxu0 0.0
  %256 = vmatprep.subr.mxu0 0.0
  %257 = vmatpush1.msra.mxu0 0.0
  %258 = vmatprep.subr.mxu0 0.0
  %259 = vmatpush1.msra.mxu0 0.0
  %260 = vmatprep.subr.mxu0 0.0
  %261 = vmatpush1.msra.mxu0 0.0
  %262 = vmatprep.subr.mxu0 0.0
  %263 = vmatpush1.msra.mxu0 0.0
  %264 = vmatprep.subr.mxu0 0.0
  %265 = vmatpush1.msra.mxu0 0.0
  %266 = vmatprep.subr.mxu0 0.0
  %267 = vmatpush1.msra.mxu0 0.0
  %268 = vmatprep.mubr.f32.mxu0 0.0
  %269 = vmatmul.mubr.f32.gmra.mrb[0].mxu0 %v202
  %v270 = vpop.f32.mrb[0].mxu0
  %v271 = vadd.f32 %v37, %v270
  %v272 = vpop.f32.mrb[0].mxu0
  %273 = vdwg.mxu0
  %v274 = vpack.c.bf16 %v193, %v193
  %276 = vrot.lane.b32.xlu0 %v274, 32
  %v277 = vpop.permute.xlu0 %276
  %v279 = vsel %vm129, %v277, 0
  %281 = vmatprep.subr.bf16.mxu0 0
  %282 = vmatpush1.bf16.msra.mxu0 %v125
  %283 = vmatprep.subr.bf16.mxu0 0
  %284 = vmatpush1.bf16.msra.mxu0 %v126
  %285 = vmatprep.subr.bf16.mxu0 0
  %286 = vmatpush1.bf16.msra.mxu0 0
  %287 = vmatprep.subr.bf16.mxu0 0
  %288 = vmatpush1.bf16.msra.mxu0 0
  %289 = vmatprep.subr.bf16.mxu0 0
  %290 = vmatpush1.bf16.msra.mxu0 0
  %291 = vmatprep.subr.bf16.mxu0 0
  %292 = vmatpush1.bf16.msra.mxu0 0
  %293 = vmatprep.subr.bf16.mxu0 0
  %294 = vmatpush1.bf16.msra.mxu0 0
  %295 = vmatprep.subr.bf16.mxu0 0
  %296 = vmatpush1.bf16.msra.mxu0 0
  %297 = vmatprep.subr.bf16.mxu0 0
  %298 = vmatpush1.bf16.msra.mxu0 0
  %299 = vmatprep.subr.bf16.mxu0 0
  %300 = vmatpush1.bf16.msra.mxu0 0
  %301 = vmatprep.subr.bf16.mxu0 0
  %302 = vmatpush1.bf16.msra.mxu0 0
  %303 = vmatprep.subr.bf16.mxu0 0
  %304 = vmatpush1.bf16.msra.mxu0 0
  %305 = vmatprep.subr.bf16.mxu0 0
  %306 = vmatpush1.bf16.msra.mxu0 0
  %307 = vmatprep.subr.bf16.mxu0 0
  %308 = vmatpush1.bf16.msra.mxu0 0
  %309 = vmatprep.subr.bf16.mxu0 0
  %310 = vmatpush1.bf16.msra.mxu0 0
  %311 = vmatprep.subr.bf16.mxu0 0
  %312 = vmatpush1.bf16.msra.mxu0 0
  %313 = vmatprep.mubr.bf16.mxu0 0
  %314 = vmatmul.mubr.bf16.gmra.mrb[0].mxu0 %v279
  %v315 = vpop.f32.mrb[0].mxu0
  %v316 = vadd.f32 0.0, %v315
  %v317 = vpop.f32.mrb[0].mxu0
  %v318 = vpop.f32.mrb[0].mxu0
  %v319 = vpop.f32.mrb[0].mxu0
  %320 = vdwg.mxu0
  %v321 = vadd.f32 %v271, %v316
  %v322 = vtanh.pop %v321
  %v323 = vmul.f32 %v322, 0.5
  %v324 = vadd.f32 %v323, 0.5
  %v325 = vmul.f32 %v324, %v187
  %327 = vrot.lane.b32.xlu0 %v322, 64
  %v328 = vpop.permute.xlu0 %327
  %v330 = vmul.f32 %v324, %v328
  %332 = vrot.lane.b32.xlu0 %v330, 32
  %v333 = vpop.permute.xlu0 %332
  %v335 = vadd.f32 %v325, %v333
  %v336 = vtanh.pop %v335
  %338 = vrot.lane.b32.xlu0 %v336, 64
  %v339 = vpop.permute.xlu0 %338
  %v341 = vmul.f32 %v324, %v339
  %343 = vrot.lane.b32.xlu0 %v341, 32
  %v344 = vpop.permute.xlu0 %343
  %346 = vst.msk [vmem:[#allocation2 + $0x2] sm:$0x3] %vm198, %v344
  %347 = vrot.lane.b32.xlu0 %v26, 120
  %v348 = vpop.permute.xlu0 %347
  %v349 = vsel %vm39, %v348, 0
  %351 = vmatprep.subr.mxu0 0.0
  %352 = vmatpush1.msra.mxu0 %v45
  %353 = vmatprep.subr.mxu0 0.0
  %354 = vmatpush1.msra.mxu0 0.0
  %355 = vmatprep.subr.mxu0 0.0
  %356 = vmatpush1.msra.mxu0 0.0
  %357 = vmatprep.subr.mxu0 0.0
  %358 = vmatpush1.msra.mxu0 0.0
  %359 = vmatprep.subr.mxu0 0.0
  %360 = vmatpush1.msra.mxu0 0.0
  %361 = vmatprep.subr.mxu0 0.0
  %362 = vmatpush1.msra.mxu0 0.0
  %363 = vmatprep.subr.mxu0 0.0
  %364 = vmatpush1.msra.mxu0 0.0
  %365 = vmatprep.subr.mxu0 0.0
  %366 = vmatpush1.msra.mxu0 0.0
  %367 = vmatprep.subr.mxu0 0.0
  %368 = vmatpush1.msra.mxu0 0.0
  %369 = vmatprep.subr.mxu0 0.0
  %370 = vmatpush1.msra.mxu0 0.0
  %371 = vmatprep.subr.mxu0 0.0
  %372 = vmatpush1.msra.mxu0 0.0
  %373 = vmatprep.subr.mxu0 0.0
  %374 = vmatpush1.msra.mxu0 0.0
  %375 = vmatprep.subr.mxu0 0.0
  %376 = vmatpush1.msra.mxu0 0.0
  %377 = vmatprep.subr.mxu0 0.0
  %378 = vmatpush1.msra.mxu0 0.0
  %379 = vmatprep.subr.mxu0 0.0
  %380 = vmatpush1.msra.mxu0 0.0
  %381 = vmatprep.subr.mxu0 0.0
  %382 = vmatpush1.msra.mxu0 0.0
  %383 = vmatprep.subr.mxu0 0.0
  %384 = vmatpush1.msra.mxu0 0.0
  %385 = vmatprep.subr.mxu0 0.0
  %386 = vmatpush1.msra.mxu0 0.0
  %387 = vmatprep.subr.mxu0 0.0
  %388 = vmatpush1.msra.mxu0 0.0
  %389 = vmatprep.subr.mxu0 0.0
  %390 = vmatpush1.msra.mxu0 0.0
  %391 = vmatprep.subr.mxu0 0.0
  %392 = vmatpush1.msra.mxu0 0.0
  %393 = vmatprep.subr.mxu0 0.0
  %394 = vmatpush1.msra.mxu0 0.0
  %395 = vmatprep.subr.mxu0 0.0
  %396 = vmatpush1.msra.mxu0 0.0
  %397 = vmatprep.subr.mxu0 0.0
  %398 = vmatpush1.msra.mxu0 0.0
  %399 = vmatprep.subr.mxu0 0.0
  %400 = vmatpush1.msra.mxu0 0.0
  %401 = vmatprep.subr.mxu0 0.0
  %402 = vmatpush1.msra.mxu0 0.0
  %403 = vmatprep.subr.mxu0 0.0
  %404 = vmatpush1.msra.mxu0 0.0
  %405 = vmatprep.subr.mxu0 0.0
  %406 = vmatpush1.msra.mxu0 0.0
  %407 = vmatprep.subr.mxu0 0.0
  %408 = vmatpush1.msra.mxu0 0.0
  %409 = vmatprep.subr.mxu0 0.0
  %410 = vmatpush1.msra.mxu0 0.0
  %411 = vmatprep.subr.mxu0 0.0
  %412 = vmatpush1.msra.mxu0 0.0
  %413 = vmatprep.subr.mxu0 0.0
  %414 = vmatpush1.msra.mxu0 0.0
  %415 = vmatprep.mubr.f32.mxu0 0.0
  %416 = vmatmul.mubr.f32.gmra.mrb[0].mxu0 %v349
  %v417 = vpop.f32.mrb[0].mxu0
  %v418 = vadd.f32 %v37, %v417
  %v419 = vpop.f32.mrb[0].mxu0
  %420 = vdwg.mxu0
  %v421 = vpack.c.bf16 %v341, %v341
  %423 = vrot.lane.b32.xlu0 %v421, 32
  %v424 = vpop.permute.xlu0 %423
  %v426 = vsel %vm129, %v424, 0
  %428 = vmatprep.subr.bf16.mxu0 0
  %429 = vmatpush1.bf16.msra.mxu0 %v125
  %430 = vmatprep.subr.bf16.mxu0 0
  %431 = vmatpush1.bf16.msra.mxu0 %v126
  %432 = vmatprep.subr.bf16.mxu0 0
  %433 = vmatpush1.bf16.msra.mxu0 0
  %434 = vmatprep.subr.bf16.mxu0 0
  %435 = vmatpush1.bf16.msra.mxu0 0
  %436 = vmatprep.subr.bf16.mxu0 0
  %437 = vmatpush1.bf16.msra.mxu0 0
  %438 = vmatprep.subr.bf16.mxu0 0
  %439 = vmatpush1.bf16.msra.mxu0 0
  %440 = vmatprep.subr.bf16.mxu0 0
  %441 = vmatpush1.bf16.msra.mxu0 0
  %442 = vmatprep.subr.bf16.mxu0 0
  %443 = vmatpush1.bf16.msra.mxu0 0
  %444 = vmatprep.subr.bf16.mxu0 0
  %445 = vmatpush1.bf16.msra.mxu0 0
  %446 = vmatprep.subr.bf16.mxu0 0
  %447 = vmatpush1.bf16.msra.mxu0 0
  %448 = vmatprep.subr.bf16.mxu0 0
  %449 = vmatpush1.bf16.msra.mxu0 0
  %450 = vmatprep.subr.bf16.mxu0 0
  %451 = vmatpush1.bf16.msra.mxu0 0
  %452 = vmatprep.subr.bf16.mxu0 0
  %453 = vmatpush1.bf16.msra.mxu0 0
  %454 = vmatprep.subr.bf16.mxu0 0
  %455 = vmatpush1.bf16.msra.mxu0 0
  %456 = vmatprep.subr.bf16.mxu0 0
  %457 = vmatpush1.bf16.msra.mxu0 0
  %458 = vmatprep.subr.bf16.mxu0 0
  %459 = vmatpush1.bf16.msra.mxu0 0
  %460 = vmatprep.mubr.bf16.mxu0 0
  %461 = vmatmul.mubr.bf16.gmra.mrb[0].mxu0 %v426
  %v462 = vpop.f32.mrb[0].mxu0
  %v463 = vadd.f32 0.0, %v462
  %v464 = vpop.f32.mrb[0].mxu0
  %v465 = vpop.f32.mrb[0].mxu0
  %v466 = vpop.f32.mrb[0].mxu0
  %467 = vdwg.mxu0
  %v468 = vadd.f32 %v418, %v463
  %v469 = vtanh.pop %v468
  %v470 = vmul.f32 %v469, 0.5
  %v471 = vadd.f32 %v470, 0.5
  %v472 = vmul.f32 %v471, %v335
  %474 = vrot.lane.b32.xlu0 %v469, 64
  %v475 = vpop.permute.xlu0 %474
  %v477 = vmul.f32 %v471, %v475
  %479 = vrot.lane.b32.xlu0 %v477, 32
  %v480 = vpop.permute.xlu0 %479
  %v482 = vadd.f32 %v472, %v480
  %v483 = vtanh.pop %v482
  %485 = vrot.lane.b32.xlu0 %v483, 64
  %v486 = vpop.permute.xlu0 %485
  %v488 = vmul.f32 %v471, %v486
  %490 = vrot.lane.b32.xlu0 %v488, 32
  %v491 = vpop.permute.xlu0 %490
  %493 = vst.msk [vmem:[#allocation2 + $0x4] sm:$0x3] %vm198, %v491
  %494 = vrot.lane.b32.xlu0 %v26, 116
  %v495 = vpop.permute.xlu0 %494
  %v496 = vsel %vm39, %v495, 0
  %498 = vmatprep.subr.mxu0 0.0
  %499 = vmatpush1.msra.mxu0 %v45
  %500 = vmatprep.subr.mxu0 0.0
  %501 = vmatpush1.msra.mxu0 0.0
  %502 = vmatprep.subr.mxu0 0.0
  %503 = vmatpush1.msra.mxu0 0.0
  %504 = vmatprep.subr.mxu0 0.0
  %505 = vmatpush1.msra.mxu0 0.0
  %506 = vmatprep.subr.mxu0 0.0
  %507 = vmatpush1.msra.mxu0 0.0
  %508 = vmatprep.subr.mxu0 0.0
  %509 = vmatpush1.msra.mxu0 0.0
  %510 = vmatprep.subr.mxu0 0.0
  %511 = vmatpush1.msra.mxu0 0.0
  %512 = vmatprep.subr.mxu0 0.0
  %513 = vmatpush1.msra.mxu0 0.0
  %514 = vmatprep.subr.mxu0 0.0
  %515 = vmatpush1.msra.mxu0 0.0
  %516 = vmatprep.subr.mxu0 0.0
  %517 = vmatpush1.msra.mxu0 0.0
  %518 = vmatprep.subr.mxu0 0.0
  %519 = vmatpush1.msra.mxu0 0.0
  %520 = vmatprep.subr.mxu0 0.0
  %521 = vmatpush1.msra.mxu0 0.0
  %522 = vmatprep.subr.mxu0 0.0
  %523 = vmatpush1.msra.mxu0 0.0
  %524 = vmatprep.subr.mxu0 0.0
  %525 = vmatpush1.msra.mxu0 0.0
  %526 = vmatprep.subr.mxu0 0.0
  %527 = vmatpush1.msra.mxu0 0.0
  %528 = vmatprep.subr.mxu0 0.0
  %529 = vmatpush1.msra.mxu0 0.0
  %530 = vmatprep.subr.mxu0 0.0
  %531 = vmatpush1.msra.mxu0 0.0
  %532 = vmatprep.subr.mxu0 0.0
  %533 = vmatpush1.msra.mxu0 0.0
  %534 = vmatprep.subr.mxu0 0.0
  %535 = vmatpush1.msra.mxu0 0.0
  %536 = vmatprep.subr.mxu0 0.0
  %537 = vmatpush1.msra.mxu0 0.0
  %538 = vmatprep.subr.mxu0 0.0
  %539 = vmatpush1.msra.mxu0 0.0
  %540 = vmatprep.subr.mxu0 0.0
  %541 = vmatpush1.msra.mxu0 0.0
  %542 = vmatprep.subr.mxu0 0.0
  %543 = vmatpush1.msra.mxu0 0.0
  %544 = vmatprep.subr.mxu0 0.0
  %545 = vmatpush1.msra.mxu0 0.0
  %546 = vmatprep.subr.mxu0 0.0
  %547 = vmatpush1.msra.mxu0 0.0
  %548 = vmatprep.subr.mxu0 0.0
  %549 = vmatpush1.msra.mxu0 0.0
  %550 = vmatprep.subr.mxu0 0.0
  %551 = vmatpush1.msra.mxu0 0.0
  %552 = vmatprep.subr.mxu0 0.0
  %553 = vmatpush1.msra.mxu0 0.0
  %554 = vmatprep.subr.mxu0 0.0
  %555 = vmatpush1.msra.mxu0 0.0
  %556 = vmatprep.subr.mxu0 0.0
  %557 = vmatpush1.msra.mxu0 0.0
  %558 = vmatprep.subr.mxu0 0.0
  %559 = vmatpush1.msra.mxu0 0.0
  %560 = vmatprep.subr.mxu0 0.0
  %561 = vmatpush1.msra.mxu0 0.0
  %562 = vmatprep.mubr.f32.mxu0 0.0
  %563 = vmatmul.mubr.f32.gmra.mrb[0].mxu0 %v496
  %v564 = vpop.f32.mrb[0].mxu0
  %v565 = vadd.f32 %v37, %v564
  %v566 = vpop.f32.mrb[0].mxu0
  %567 = vdwg.mxu0
  %v568 = vpack.c.bf16 %v488, %v488
  %570 = vrot.lane.b32.xlu0 %v568, 32
  %v571 = vpop.permute.xlu0 %570
  %v573 = vsel %vm129, %v571, 0
  %575 = vmatprep.subr.bf16.mxu0 0
  %576 = vmatpush1.bf16.msra.mxu0 %v125
  %577 = vmatprep.subr.bf16.mxu0 0
  %578 = vmatpush1.bf16.msra.mxu0 %v126
  %579 = vmatprep.subr.bf16.mxu0 0
  %580 = vmatpush1.bf16.msra.mxu0 0
  %581 = vmatprep.subr.bf16.mxu0 0
  %582 = vmatpush1.bf16.msra.mxu0 0
  %583 = vmatprep.subr.bf16.mxu0 0
  %584 = vmatpush1.bf16.msra.mxu0 0
  %585 = vmatprep.subr.bf16.mxu0 0
  %586 = vmatpush1.bf16.msra.mxu0 0
  %587 = vmatprep.subr.bf16.mxu0 0
  %588 = vmatpush1.bf16.msra.mxu0 0
  %589 = vmatprep.subr.bf16.mxu0 0
  %590 = vmatpush1.bf16.msra.mxu0 0
  %591 = vmatprep.subr.bf16.mxu0 0
  %592 = vmatpush1.bf16.msra.mxu0 0
  %593 = vmatprep.subr.bf16.mxu0 0
  %594 = vmatpush1.bf16.msra.mxu0 0
  %595 = vmatprep.subr.bf16.mxu0 0
  %596 = vmatpush1.bf16.msra.mxu0 0
  %597 = vmatprep.subr.bf16.mxu0 0
  %598 = vmatpush1.bf16.msra.mxu0 0
  %599 = vmatprep.subr.bf16.mxu0 0
  %600 = vmatpush1.bf16.msra.mxu0 0
  %601 = vmatprep.subr.bf16.mxu0 0
  %602 = vmatpush1.bf16.msra.mxu0 0
  %603 = vmatprep.subr.bf16.mxu0 0
  %604 = vmatpush1.bf16.msra.mxu0 0
  %605 = vmatprep.subr.bf16.mxu0 0
  %606 = vmatpush1.bf16.msra.mxu0 0
  %607 = vmatprep.mubr.bf16.mxu0 0
  %608 = vmatmul.mubr.bf16.gmra.mrb[0].mxu0 %v573
  %v609 = vpop.f32.mrb[0].mxu0
  %v610 = vadd.f32 0.0, %v609
  %v611 = vpop.f32.mrb[0].mxu0
  %v612 = vpop.f32.mrb[0].mxu0
  %v613 = vpop.f32.mrb[0].mxu0
  %614 = vdwg.mxu0
  %v615 = vadd.f32 %v565, %v610
  %v616 = vtanh.pop %v615
  %v617 = vmul.f32 %v616, 0.5
  %v618 = vadd.f32 %v617, 0.5
  %v619 = vmul.f32 %v618, %v482
  %621 = vrot.lane.b32.xlu0 %v616, 64
  %v622 = vpop.permute.xlu0 %621
  %v624 = vmul.f32 %v618, %v622
  %626 = vrot.lane.b32.xlu0 %v624, 32
  %v627 = vpop.permute.xlu0 %626
  %v629 = vadd.f32 %v619, %v627
  %v630 = vtanh.pop %v629
  %632 = vrot.lane.b32.xlu0 %v630, 64
  %v633 = vpop.permute.xlu0 %632
  %v635 = vmul.f32 %v618, %v633
  %637 = vrot.lane.b32.xlu0 %v635, 32
  %v638 = vpop.permute.xlu0 %637
  %640 = vst.msk [vmem:[#allocation2 + $0x6] sm:$0x3] %vm198, %v638
  %641 = vrot.lane.b32.xlu0 %v26, 112
  %v642 = vpop.permute.xlu0 %641
  %v643 = vsel %vm39, %v642, 0
  %645 = vmatprep.subr.mxu0 0.0
  %646 = vmatpush1.msra.mxu0 %v45
  %647 = vmatprep.subr.mxu0 0.0
  %648 = vmatpush1.msra.mxu0 0.0
  %649 = vmatprep.subr.mxu0 0.0
  %650 = vmatpush1.msra.mxu0 0.0
  %651 = vmatprep.subr.mxu0 0.0
  %652 = vmatpush1.msra.mxu0 0.0
  %653 = vmatprep.subr.mxu0 0.0
  %654 = vmatpush1.msra.mxu0 0.0
  %655 = vmatprep.subr.mxu0 0.0
  %656 = vmatpush1.msra.mxu0 0.0
  %657 = vmatprep.subr.mxu0 0.0
  %658 = vmatpush1.msra.mxu0 0.0
  %659 = vmatprep.subr.mxu0 0.0
  %660 = vmatpush1.msra.mxu0 0.0
  %661 = vmatprep.subr.mxu0 0.0
  %662 = vmatpush1.msra.mxu0 0.0
  %663 = vmatprep.subr.mxu0 0.0
  %664 = vmatpush1.msra.mxu0 0.0
  %665 = vmatprep.subr.mxu0 0.0
  %666 = vmatpush1.msra.mxu0 0.0
  %667 = vmatprep.subr.mxu0 0.0
  %668 = vmatpush1.msra.mxu0 0.0
  %669 = vmatprep.subr.mxu0 0.0
  %670 = vmatpush1.msra.mxu0 0.0
  %671 = vmatprep.subr.mxu0 0.0
  %672 = vmatpush1.msra.mxu0 0.0
  %673 = vmatprep.subr.mxu0 0.0
  %674 = vmatpush1.msra.mxu0 0.0
  %675 = vmatprep.subr.mxu0 0.0
  %676 = vmatpush1.msra.mxu0 0.0
  %677 = vmatprep.subr.mxu0 0.0
  %678 = vmatpush1.msra.mxu0 0.0
  %679 = vmatprep.subr.mxu0 0.0
  %680 = vmatpush1.msra.mxu0 0.0
  %681 = vmatprep.subr.mxu0 0.0
  %682 = vmatpush1.msra.mxu0 0.0
  %683 = vmatprep.subr.mxu0 0.0
  %684 = vmatpush1.msra.mxu0 0.0
  %685 = vmatprep.subr.mxu0 0.0
  %686 = vmatpush1.msra.mxu0 0.0
  %687 = vmatprep.subr.mxu0 0.0
  %688 = vmatpush1.msra.mxu0 0.0
  %689 = vmatprep.subr.mxu0 0.0
  %690 = vmatpush1.msra.mxu0 0.0
  %691 = vmatprep.subr.mxu0 0.0
  %692 = vmatpush1.msra.mxu0 0.0
  %693 = vmatprep.subr.mxu0 0.0
  %694 = vmatpush1.msra.mxu0 0.0
  %695 = vmatprep.subr.mxu0 0.0
  %696 = vmatpush1.msra.mxu0 0.0
  %697 = vmatprep.subr.mxu0 0.0
  %698 = vmatpush1.msra.mxu0 0.0
  %699 = vmatprep.subr.mxu0 0.0
  %700 = vmatpush1.msra.mxu0 0.0
  %701 = vmatprep.subr.mxu0 0.0
  %702 = vmatpush1.msra.mxu0 0.0
  %703 = vmatprep.subr.mxu0 0.0
  %704 = vmatpush1.msra.mxu0 0.0
  %705 = vmatprep.subr.mxu0 0.0
  %706 = vmatpush1.msra.mxu0 0.0
  %707 = vmatprep.subr.mxu0 0.0
  %708 = vmatpush1.msra.mxu0 0.0
  %709 = vmatprep.mubr.f32.mxu0 0.0
  %710 = vmatmul.mubr.f32.gmra.mrb[0].mxu0 %v643
  %v711 = vpop.f32.mrb[0].mxu0
  %v712 = vadd.f32 %v37, %v711
  %v713 = vpop.f32.mrb[0].mxu0
  %714 = vdwg.mxu0
  %v715 = vpack.c.bf16 %v635, %v635
  %717 = vrot.lane.b32.xlu0 %v715, 32
  %v718 = vpop.permute.xlu0 %717
  %v720 = vsel %vm129, %v718, 0
  %722 = vmatprep.subr.bf16.mxu0 0
  %723 = vmatpush1.bf16.msra.mxu0 %v125
  %724 = vmatprep.subr.bf16.mxu0 0
  %725 = vmatpush1.bf16.msra.mxu0 %v126
  %726 = vmatprep.subr.bf16.mxu0 0
  %727 = vmatpush1.bf16.msra.mxu0 0
  %728 = vmatprep.subr.bf16.mxu0 0
  %729 = vmatpush1.bf16.msra.mxu0 0
  %730 = vmatprep.subr.bf16.mxu0 0
  %731 = vmatpush1.bf16.msra.mxu0 0
  %732 = vmatprep.subr.bf16.mxu0 0
  %733 = vmatpush1.bf16.msra.mxu0 0
  %734 = vmatprep.subr.bf16.mxu0 0
  %735 = vmatpush1.bf16.msra.mxu0 0
  %736 = vmatprep.subr.bf16.mxu0 0
  %737 = vmatpush1.bf16.msra.mxu0 0
  %738 = vmatprep.subr.bf16.mxu0 0
  %739 = vmatpush1.bf16.msra.mxu0 0
  %740 = vmatprep.subr.bf16.mxu0 0
  %741 = vmatpush1.bf16.msra.mxu0 0
  %742 = vmatprep.subr.bf16.mxu0 0
  %743 = vmatpush1.bf16.msra.mxu0 0
  %744 = vmatprep.subr.bf16.mxu0 0
  %745 = vmatpush1.bf16.msra.mxu0 0
  %746 = vmatprep.subr.bf16.mxu0 0
  %747 = vmatpush1.bf16.msra.mxu0 0
  %748 = vmatprep.subr.bf16.mxu0 0
  %749 = vmatpush1.bf16.msra.mxu0 0
  %750 = vmatprep.subr.bf16.mxu0 0
  %751 = vmatpush1.bf16.msra.mxu0 0
  %752 = vmatprep.subr.bf16.mxu0 0
  %753 = vmatpush1.bf16.msra.mxu0 0
  %754 = vmatprep.mubr.bf16.mxu0 0
  %755 = vmatmul.mubr.bf16.gmra.mrb[0].mxu0 %v720
  %v756 = vpop.f32.mrb[0].mxu0
  %v757 = vadd.f32 0.0, %v756
  %v758 = vpop.f32.mrb[0].mxu0
  %v759 = vpop.f32.mrb[0].mxu0
  %v760 = vpop.f32.mrb[0].mxu0
  %761 = vdwg.mxu0
  %v762 = vadd.f32 %v712, %v757
  %v763 = vtanh.pop %v762
  %v764 = vmul.f32 %v763, 0.5
  %v765 = vadd.f32 %v764, 0.5
  %v766 = vmul.f32 %v765, %v629
  %768 = vrot.lane.b32.xlu0 %v763, 64
  %v769 = vpop.permute.xlu0 %768
  %v771 = vmul.f32 %v765, %v769
  %773 = vrot.lane.b32.xlu0 %v771, 32
  %v774 = vpop.permute.xlu0 %773
  %v776 = vadd.f32 %v766, %v774
  %v777 = vtanh.pop %v776
  %779 = vrot.lane.b32.xlu0 %v777, 64
  %v780 = vpop.permute.xlu0 %779
  %v782 = vmul.f32 %v765, %v780
  %784 = vrot.lane.b32.xlu0 %v782, 32
  %v785 = vpop.permute.xlu0 %784
  %787 = vst.msk [vmem:[#allocation2 + $0x8] sm:$0x3] %vm198, %v785
  %788 = vrot.lane.b32.xlu0 %v26, 108
  %v789 = vpop.permute.xlu0 %788
  %v790 = vsel %vm39, %v789, 0
  %792 = vmatprep.subr.mxu0 0.0
  %793 = vmatpush1.msra.mxu0 %v45
  %794 = vmatprep.subr.mxu0 0.0
  %795 = vmatpush1.msra.mxu0 0.0
  %796 = vmatprep.subr.mxu0 0.0
  %797 = vmatpush1.msra.mxu0 0.0
  %798 = vmatprep.subr.mxu0 0.0
  %799 = vmatpush1.msra.mxu0 0.0
  %800 = vmatprep.subr.mxu0 0.0
  %801 = vmatpush1.msra.mxu0 0.0
  %802 = vmatprep.subr.mxu0 0.0
  %803 = vmatpush1.msra.mxu0 0.0
  %804 = vmatprep.subr.mxu0 0.0
  %805 = vmatpush1.msra.mxu0 0.0
  %806 = vmatprep.subr.mxu0 0.0
  %807 = vmatpush1.msra.mxu0 0.0
  %808 = vmatprep.subr.mxu0 0.0
  %809 = vmatpush1.msra.mxu0 0.0
  %810 = vmatprep.subr.mxu0 0.0
  %811 = vmatpush1.msra.mxu0 0.0
  %812 = vmatprep.subr.mxu0 0.0
  %813 = vmatpush1.msra.mxu0 0.0
  %814 = vmatprep.subr.mxu0 0.0
  %815 = vmatpush1.msra.mxu0 0.0
  %816 = vmatprep.subr.mxu0 0.0
  %817 = vmatpush1.msra.mxu0 0.0
  %818 = vmatprep.subr.mxu0 0.0
  %819 = vmatpush1.msra.mxu0 0.0
  %820 = vmatprep.subr.mxu0 0.0
  %821 = vmatpush1.msra.mxu0 0.0
  %822 = vmatprep.subr.mxu0 0.0
  %823 = vmatpush1.msra.mxu0 0.0
  %824 = vmatprep.subr.mxu0 0.0
  %825 = vmatpush1.msra.mxu0 0.0
  %826 = vmatprep.subr.mxu0 0.0
  %827 = vmatpush1.msra.mxu0 0.0
  %828 = vmatprep.subr.mxu0 0.0
  %829 = vmatpush1.msra.mxu0 0.0
  %830 = vmatprep.subr.mxu0 0.0
  %831 = vmatpush1.msra.mxu0 0.0
  %832 = vmatprep.subr.mxu0 0.0
  %833 = vmatpush1.msra.mxu0 0.0
  %834 = vmatprep.subr.mxu0 0.0
  %835 = vmatpush1.msra.mxu0 0.0
  %836 = vmatprep.subr.mxu0 0.0
  %837 = vmatpush1.msra.mxu0 0.0
  %838 = vmatprep.subr.mxu0 0.0
  %839 = vmatpush1.msra.mxu0 0.0
  %840 = vmatprep.subr.mxu0 0.0
  %841 = vmatpush1.msra.mxu0 0.0
  %842 = vmatprep.subr.mxu0 0.0
  %843 = vmatpush1.msra.mxu0 0.0
  %844 = vmatprep.subr.mxu0 0.0
  %845 = vmatpush1.msra.mxu0 0.0
  %846 = vmatprep.subr.mxu0 0.0
  %847 = vmatpush1.msra.mxu0 0.0
  %848 = vmatprep.subr.mxu0 0.0
  %849 = vmatpush1.msra.mxu0 0.0
  %850 = vmatprep.subr.mxu0 0.0
  %851 = vmatpush1.msra.mxu0 0.0
  %852 = vmatprep.subr.mxu0 0.0
  %853 = vmatpush1.msra.mxu0 0.0
  %854 = vmatprep.subr.mxu0 0.0
  %855 = vmatpush1.msra.mxu0 0.0
  %856 = vmatprep.mubr.f32.mxu0 0.0
  %857 = vmatmul.mubr.f32.gmra.mrb[0].mxu0 %v790
  %v858 = vpop.f32.mrb[0].mxu0
  %v859 = vadd.f32 %v37, %v858
  %v860 = vpop.f32.mrb[0].mxu0
  %861 = vdwg.mxu0
  %v862 = vpack.c.bf16 %v782, %v782
  %864 = vrot.lane.b32.xlu0 %v862, 32
  %v865 = vpop.permute.xlu0 %864
  %v867 = vsel %vm129, %v865, 0
  %869 = vmatprep.subr.bf16.mxu0 0
  %870 = vmatpush1.bf16.msra.mxu0 %v125
  %871 = vmatprep.subr.bf16.mxu0 0
  %872 = vmatpush1.bf16.msra.mxu0 %v126
  %873 = vmatprep.subr.bf16.mxu0 0
  %874 = vmatpush1.bf16.msra.mxu0 0
  %875 = vmatprep.subr.bf16.mxu0 0
  %876 = vmatpush1.bf16.msra.mxu0 0
  %877 = vmatprep.subr.bf16.mxu0 0
  %878 = vmatpush1.bf16.msra.mxu0 0
  %879 = vmatprep.subr.bf16.mxu0 0
  %880 = vmatpush1.bf16.msra.mxu0 0
  %881 = vmatprep.subr.bf16.mxu0 0
  %882 = vmatpush1.bf16.msra.mxu0 0
  %883 = vmatprep.subr.bf16.mxu0 0
  %884 = vmatpush1.bf16.msra.mxu0 0
  %885 = vmatprep.subr.bf16.mxu0 0
  %886 = vmatpush1.bf16.msra.mxu0 0
  %887 = vmatprep.subr.bf16.mxu0 0
  %888 = vmatpush1.bf16.msra.mxu0 0
  %889 = vmatprep.subr.bf16.mxu0 0
  %890 = vmatpush1.bf16.msra.mxu0 0
  %891 = vmatprep.subr.bf16.mxu0 0
  %892 = vmatpush1.bf16.msra.mxu0 0
  %893 = vmatprep.subr.bf16.mxu0 0
  %894 = vmatpush1.bf16.msra.mxu0 0
  %895 = vmatprep.subr.bf16.mxu0 0
  %896 = vmatpush1.bf16.msra.mxu0 0
  %897 = vmatprep.subr.bf16.mxu0 0
  %898 = vmatpush1.bf16.msra.mxu0 0
  %899 = vmatprep.subr.bf16.mxu0 0
  %900 = vmatpush1.bf16.msra.mxu0 0
  %901 = vmatprep.mubr.bf16.mxu0 0
  %902 = vmatmul.mubr.bf16.gmra.mrb[0].mxu0 %v867
  %v903 = vpop.f32.mrb[0].mxu0
  %v904 = vadd.f32 0.0, %v903
  %v905 = vpop.f32.mrb[0].mxu0
  %v906 = vpop.f32.mrb[0].mxu0
  %v907 = vpop.f32.mrb[0].mxu0
  %908 = vdwg.mxu0
  %v909 = vadd.f32 %v859, %v904
  %v910 = vtanh.pop %v909
  %v911 = vmul.f32 %v910, 0.5
  %v912 = vadd.f32 %v911, 0.5
  %v913 = vmul.f32 %v912, %v776
  %915 = vrot.lane.b32.xlu0 %v910, 64
  %v916 = vpop.permute.xlu0 %915
  %v918 = vmul.f32 %v912, %v916
  %920 = vrot.lane.b32.xlu0 %v918, 32
  %v921 = vpop.permute.xlu0 %920
  %v923 = vadd.f32 %v913, %v921
  %v924 = vtanh.pop %v923
  %926 = vrot.lane.b32.xlu0 %v924, 64
  %v927 = vpop.permute.xlu0 %926
  %v929 = vmul.f32 %v912, %v927
  %931 = vrot.lane.b32.xlu0 %v929, 32
  %v932 = vpop.permute.xlu0 %931
  %934 = vst.msk [vmem:[#allocation2 + $0xa] sm:$0x3] %vm198, %v932
  %935 = vrot.lane.b32.xlu0 %v26, 104
  %v936 = vpop.permute.xlu0 %935
  %v937 = vsel %vm39, %v936, 0
  %939 = vmatprep.subr.mxu0 0.0
  %940 = vmatpush1.msra.mxu0 %v45
  %941 = vmatprep.subr.mxu0 0.0
  %942 = vmatpush1.msra.mxu0 0.0
  %943 = vmatprep.subr.mxu0 0.0
  %944 = vmatpush1.msra.mxu0 0.0
  %945 = vmatprep.subr.mxu0 0.0
  %946 = vmatpush1.msra.mxu0 0.0
  %947 = vmatprep.subr.mxu0 0.0
  %948 = vmatpush1.msra.mxu0 0.0
  %949 = vmatprep.subr.mxu0 0.0
  %950 = vmatpush1.msra.mxu0 0.0
  %951 = vmatprep.subr.mxu0 0.0
  %952 = vmatpush1.msra.mxu0 0.0
  %953 = vmatprep.subr.mxu0 0.0
  %954 = vmatpush1.msra.mxu0 0.0
  %955 = vmatprep.subr.mxu0 0.0
  %956 = vmatpush1.msra.mxu0 0.0
  %957 = vmatprep.subr.mxu0 0.0
  %958 = vmatpush1.msra.mxu0 0.0
  %959 = vmatprep.subr.mxu0 0.0
  %960 = vmatpush1.msra.mxu0 0.0
  %961 = vmatprep.subr.mxu0 0.0
  %962 = vmatpush1.msra.mxu0 0.0
  %963 = vmatprep.subr.mxu0 0.0
  %964 = vmatpush1.msra.mxu0 0.0
  %965 = vmatprep.subr.mxu0 0.0
  %966 = vmatpush1.msra.mxu0 0.0
  %967 = vmatprep.subr.mxu0 0.0
  %968 = vmatpush1.msra.mxu0 0.0
  %969 = vmatprep.subr.mxu0 0.0
  %970 = vmatpush1.msra.mxu0 0.0
  %971 = vmatprep.subr.mxu0 0.0
  %972 = vmatpush1.msra.mxu0 0.0
  %973 = vmatprep.subr.mxu0 0.0
  %974 = vmatpush1.msra.mxu0 0.0
  %975 = vmatprep.subr.mxu0 0.0
  %976 = vmatpush1.msra.mxu0 0.0
  %977 = vmatprep.subr.mxu0 0.0
  %978 = vmatpush1.msra.mxu0 0.0
  %979 = vmatprep.subr.mxu0 0.0
  %980 = vmatpush1.msra.mxu0 0.0
  %981 = vmatprep.subr.mxu0 0.0
  %982 = vmatpush1.msra.mxu0 0.0
  %983 = vmatprep.subr.mxu0 0.0
  %984 = vmatpush1.msra.mxu0 0.0
  %985 = vmatprep.subr.mxu0 0.0
  %986 = vmatpush1.msra.mxu0 0.0
  %987 = vmatprep.subr.mxu0 0.0
  %988 = vmatpush1.msra.mxu0 0.0
  %989 = vmatprep.subr.mxu0 0.0
  %990 = vmatpush1.msra.mxu0 0.0
  %991 = vmatprep.subr.mxu0 0.0
  %992 = vmatpush1.msra.mxu0 0.0
  %993 = vmatprep.subr.mxu0 0.0
  %994 = vmatpush1.msra.mxu0 0.0
  %995 = vmatprep.subr.mxu0 0.0
  %996 = vmatpush1.msra.mxu0 0.0
  %997 = vmatprep.subr.mxu0 0.0
  %998 = vmatpush1.msra.mxu0 0.0
  %999 = vmatprep.subr.mxu0 0.0
  %1000 = vmatpush1.msra.mxu0 0.0
  %1001 = vmatprep.subr.mxu0 0.0
  %1002 = vmatpush1.msra.mxu0 0.0
  %1003 = vmatprep.mubr.f32.mxu0 0.0
  %1004 = vmatmul.mubr.f32.gmra.mrb[0].mxu0 %v937
  %v1005 = vpop.f32.mrb[0].mxu0
  %v1006 = vadd.f32 %v37, %v1005
  %v1007 = vpop.f32.mrb[0].mxu0
  %1008 = vdwg.mxu0
  %v1009 = vpack.c.bf16 %v929, %v929
  %1011 = vrot.lane.b32.xlu0 %v1009, 32
  %v1012 = vpop.permute.xlu0 %1011
  %v1014 = vsel %vm129, %v1012, 0
  %1016 = vmatprep.subr.bf16.mxu0 0
  %1017 = vmatpush1.bf16.msra.mxu0 %v125
  %1018 = vmatprep.subr.bf16.mxu0 0
  %1019 = vmatpush1.bf16.msra.mxu0 %v126
  %1020 = vmatprep.subr.bf16.mxu0 0
  %1021 = vmatpush1.bf16.msra.mxu0 0
  %1022 = vmatprep.subr.bf16.mxu0 0
  %1023 = vmatpush1.bf16.msra.mxu0 0
  %1024 = vmatprep.subr.bf16.mxu0 0
  %1025 = vmatpush1.bf16.msra.mxu0 0
  %1026 = vmatprep.subr.bf16.mxu0 0
  %1027 = vmatpush1.bf16.msra.mxu0 0
  %1028 = vmatprep.subr.bf16.mxu0 0
  %1029 = vmatpush1.bf16.msra.mxu0 0
  %1030 = vmatprep.subr.bf16.mxu0 0
  %1031 = vmatpush1.bf16.msra.mxu0 0
  %1032 = vmatprep.subr.bf16.mxu0 0
  %1033 = vmatpush1.bf16.msra.mxu0 0
  %1034 = vmatprep.subr.bf16.mxu0 0
  %1035 = vmatpush1.bf16.msra.mxu0 0
  %1036 = vmatprep.subr.bf16.mxu0 0
  %1037 = vmatpush1.bf16.msra.mxu0 0
  %1038 = vmatprep.subr.bf16.mxu0 0
  %1039 = vmatpush1.bf16.msra.mxu0 0
  %1040 = vmatprep.subr.bf16.mxu0 0
  %1041 = vmatpush1.bf16.msra.mxu0 0
  %1042 = vmatprep.subr.bf16.mxu0 0
  %1043 = vmatpush1.bf16.msra.mxu0 0
  %1044 = vmatprep.subr.bf16.mxu0 0
  %1045 = vmatpush1.bf16.msra.mxu0 0
  %1046 = vmatprep.subr.bf16.mxu0 0
  %1047 = vmatpush1.bf16.msra.mxu0 0
  %1048 = vmatprep.mubr.bf16.mxu0 0
  %1049 = vmatmul.mubr.bf16.gmra.mrb[0].mxu0 %v1014
  %v1050 = vpop.f32.mrb[0].mxu0
  %v1051 = vadd.f32 0.0, %v1050
  %v1052 = vpop.f32.mrb[0].mxu0
  %v1053 = vpop.f32.mrb[0].mxu0
  %v1054 = vpop.f32.mrb[0].mxu0
  %1055 = vdwg.mxu0
  %v1056 = vadd.f32 %v1006, %v1051
  %v1057 = vtanh.pop %v1056
  %v1058 = vmul.f32 %v1057, 0.5
  %v1059 = vadd.f32 %v1058, 0.5
  %v1060 = vmul.f32 %v1059, %v923
  %1062 = vrot.lane.b32.xlu0 %v1057, 64
  %v1063 = vpop.permute.xlu0 %1062
  %v1065 = vmul.f32 %v1059, %v1063
  %1067 = vrot.lane.b32.xlu0 %v1065, 32
  %v1068 = vpop.permute.xlu0 %1067
  %v1070 = vadd.f32 %v1060, %v1068
  %v1071 = vtanh.pop %v1070
  %1073 = vrot.lane.b32.xlu0 %v1071, 64
  %v1074 = vpop.permute.xlu0 %1073
  %v1076 = vmul.f32 %v1059, %v1074
  %1078 = vrot.lane.b32.xlu0 %v1076, 32
  %v1079 = vpop.permute.xlu0 %1078
  %1081 = vst.msk [vmem:[#allocation2 + $0xc] sm:$0x3] %vm198, %v1079
  %1082 = vrot.lane.b32.xlu0 %v26, 100
  %v1083 = vpop.permute.xlu0 %1082
  %v1084 = vsel %vm39, %v1083, 0
  %1086 = vmatprep.subr.mxu0 0.0
  %1087 = vmatpush1.msra.mxu0 %v45
  %1088 = vmatprep.subr.mxu0 0.0
  %1089 = vmatpush1.msra.mxu0 0.0
  %1090 = vmatprep.subr.mxu0 0.0
  %1091 = vmatpush1.msra.mxu0 0.0
  %1092 = vmatprep.subr.mxu0 0.0
  %1093 = vmatpush1.msra.mxu0 0.0
  %1094 = vmatprep.subr.mxu0 0.0
  %1095 = vmatpush1.msra.mxu0 0.0
  %1096 = vmatprep.subr.mxu0 0.0
  %1097 = vmatpush1.msra.mxu0 0.0
  %1098 = vmatprep.subr.mxu0 0.0
  %1099 = vmatpush1.msra.mxu0 0.0
  %1100 = vmatprep.subr.mxu0 0.0
  %1101 = vmatpush1.msra.mxu0 0.0
  %1102 = vmatprep.subr.mxu0 0.0
  %1103 = vmatpush1.msra.mxu0 0.0
  %1104 = vmatprep.subr.mxu0 0.0
  %1105 = vmatpush1.msra.mxu0 0.0
  %1106 = vmatprep.subr.mxu0 0.0
  %1107 = vmatpush1.msra.mxu0 0.0
  %1108 = vmatprep.subr.mxu0 0.0
  %1109 = vmatpush1.msra.mxu0 0.0
  %1110 = vmatprep.subr.mxu0 0.0
  %1111 = vmatpush1.msra.mxu0 0.0
  %1112 = vmatprep.subr.mxu0 0.0
  %1113 = vmatpush1.msra.mxu0 0.0
  %1114 = vmatprep.subr.mxu0 0.0
  %1115 = vmatpush1.msra.mxu0 0.0
  %1116 = vmatprep.subr.mxu0 0.0
  %1117 = vmatpush1.msra.mxu0 0.0
  %1118 = vmatprep.subr.mxu0 0.0
  %1119 = vmatpush1.msra.mxu0 0.0
  %1120 = vmatprep.subr.mxu0 0.0
  %1121 = vmatpush1.msra.mxu0 0.0
  %1122 = vmatprep.subr.mxu0 0.0
  %1123 = vmatpush1.msra.mxu0 0.0
  %1124 = vmatprep.subr.mxu0 0.0
  %1125 = vmatpush1.msra.mxu0 0.0
  %1126 = vmatprep.subr.mxu0 0.0
  %1127 = vmatpush1.msra.mxu0 0.0
  %1128 = vmatprep.subr.mxu0 0.0
  %1129 = vmatpush1.msra.mxu0 0.0
  %1130 = vmatprep.subr.mxu0 0.0
  %1131 = vmatpush1.msra.mxu0 0.0
  %1132 = vmatprep.subr.mxu0 0.0
  %1133 = vmatpush1.msra.mxu0 0.0
  %1134 = vmatprep.subr.mxu0 0.0
  %1135 = vmatpush1.msra.mxu0 0.0
  %1136 = vmatprep.subr.mxu0 0.0
  %1137 = vmatpush1.msra.mxu0 0.0
  %1138 = vmatprep.subr.mxu0 0.0
  %1139 = vmatpush1.msra.mxu0 0.0
  %1140 = vmatprep.subr.mxu0 0.0
  %1141 = vmatpush1.msra.mxu0 0.0
  %1142 = vmatprep.subr.mxu0 0.0
  %1143 = vmatpush1.msra.mxu0 0.0
  %1144 = vmatprep.subr.mxu0 0.0
  %1145 = vmatpush1.msra.mxu0 0.0
  %1146 = vmatprep.subr.mxu0 0.0
  %1147 = vmatpush1.msra.mxu0 0.0
  %1148 = vmatprep.subr.mxu0 0.0
  %1149 = vmatpush1.msra.mxu0 0.0
  %1150 = vmatprep.mubr.f32.mxu0 0.0
  %1151 = vmatmul.mubr.f32.gmra.mrb[0].mxu0 %v1084
  %v1152 = vpop.f32.mrb[0].mxu0
  %v1153 = vadd.f32 %v37, %v1152
  %v1154 = vpop.f32.mrb[0].mxu0
  %1155 = vdwg.mxu0
  %v1156 = vpack.c.bf16 %v1076, %v1076
  %1158 = vrot.lane.b32.xlu0 %v1156, 32
  %v1159 = vpop.permute.xlu0 %1158
  %v1161 = vsel %vm129, %v1159, 0
  %1163 = vmatprep.subr.bf16.mxu0 0
  %1164 = vmatpush1.bf16.msra.mxu0 %v125
  %1165 = vmatprep.subr.bf16.mxu0 0
  %1166 = vmatpush1.bf16.msra.mxu0 %v126
  %1167 = vmatprep.subr.bf16.mxu0 0
  %1168 = vmatpush1.bf16.msra.mxu0 0
  %1169 = vmatprep.subr.bf16.mxu0 0
  %1170 = vmatpush1.bf16.msra.mxu0 0
  %1171 = vmatprep.subr.bf16.mxu0 0
  %1172 = vmatpush1.bf16.msra.mxu0 0
  %1173 = vmatprep.subr.bf16.mxu0 0
  %1174 = vmatpush1.bf16.msra.mxu0 0
  %1175 = vmatprep.subr.bf16.mxu0 0
  %1176 = vmatpush1.bf16.msra.mxu0 0
  %1177 = vmatprep.subr.bf16.mxu0 0
  %1178 = vmatpush1.bf16.msra.mxu0 0
  %1179 = vmatprep.subr.bf16.mxu0 0
  %1180 = vmatpush1.bf16.msra.mxu0 0
  %1181 = vmatprep.subr.bf16.mxu0 0
  %1182 = vmatpush1.bf16.msra.mxu0 0
  %1183 = vmatprep.subr.bf16.mxu0 0
  %1184 = vmatpush1.bf16.msra.mxu0 0
  %1185 = vmatprep.subr.bf16.mxu0 0
  %1186 = vmatpush1.bf16.msra.mxu0 0
  %1187 = vmatprep.subr.bf16.mxu0 0
  %1188 = vmatpush1.bf16.msra.mxu0 0
  %1189 = vmatprep.subr.bf16.mxu0 0
  %1190 = vmatpush1.bf16.msra.mxu0 0
  %1191 = vmatprep.subr.bf16.mxu0 0
  %1192 = vmatpush1.bf16.msra.mxu0 0
  %1193 = vmatprep.subr.bf16.mxu0 0
  %1194 = vmatpush1.bf16.msra.mxu0 0
  %1195 = vmatprep.mubr.bf16.mxu0 0
  %1196 = vmatmul.mubr.bf16.gmra.mrb[0].mxu0 %v1161
  %v1197 = vpop.f32.mrb[0].mxu0
  %v1198 = vadd.f32 0.0, %v1197
  %v1199 = vpop.f32.mrb[0].mxu0
  %v1200 = vpop.f32.mrb[0].mxu0
  %v1201 = vpop.f32.mrb[0].mxu0
  %1202 = vdwg.mxu0
  %v1203 = vadd.f32 %v1153, %v1198
  %v1204 = vtanh.pop %v1203
  %v1205 = vmul.f32 %v1204, 0.5
  %v1206 = vadd.f32 %v1205, 0.5
  %v1207 = vmul.f32 %v1206, %v1070
  %1209 = vrot.lane.b32.xlu0 %v1204, 64
  %v1210 = vpop.permute.xlu0 %1209
  %v1212 = vmul.f32 %v1206, %v1210
  %1214 = vrot.lane.b32.xlu0 %v1212, 32
  %v1215 = vpop.permute.xlu0 %1214
  %v1217 = vadd.f32 %v1207, %v1215
  %v1218 = vtanh.pop %v1217
  %1220 = vrot.lane.b32.xlu0 %v1218, 64
  %v1221 = vpop.permute.xlu0 %1220
  %v1223 = vmul.f32 %v1206, %v1221
  %1225 = vrot.lane.b32.xlu0 %v1223, 32
  %v1226 = vpop.permute.xlu0 %1225
  %1228 = vst.msk [vmem:[#allocation2 + $0xe] sm:$0x3] %vm198, %v1226
  %v1229 = vld [vmem:[#allocation2] sm:$0xff]
  %v1230 = vld [vmem:[#allocation2 + $0x8] sm:$0xff]
  %v1231 = vld [vmem:[%s4] sm:$0xff]
  %v1232 = vld [vmem:[%s4 + $0x8] sm:$0xff]
  %v1233 = vld [vmem:[%s4 + $0x10] sm:$0xff]
  %v1234 = vld [vmem:[%s4 + $0x18] sm:$0xff]
  %v1235 = vld [vmem:[#allocation3] sm:$0x1]
  %v1237 = vlaneseq
  %v1238 = vshrl.u32 %v1237, 7
  %v1239 = vsub.s32 0, %v1238
  %v1240 = vrot.slane %v1235, %v1239
  %v1243 = vsel %vm129, %v1229, 0
  %v1246 = vsel %vm129, %v1230, 0
  %1248 = vmatprep.subr.mxu0 0.0
  %1249 = vmatpush1.msra.mxu0 %v1231
  %1250 = vmatprep.subr.mxu0 0.0
  %1251 = vmatpush1.msra.mxu0 %v1232
  %1252 = vmatprep.subr.mxu0 0.0
  %1253 = vmatpush1.msra.mxu0 %v1233
  %1254 = vmatprep.subr.mxu0 0.0
  %1255 = vmatpush1.msra.mxu0 %v1234
  %1256 = vmatprep.subr.mxu0 0.0
  %1257 = vmatpush1.msra.mxu0 0.0
  %1258 = vmatprep.subr.mxu0 0.0
  %1259 = vmatpush1.msra.mxu0 0.0
  %1260 = vmatprep.subr.mxu0 0.0
  %1261 = vmatpush1.msra.mxu0 0.0
  %1262 = vmatprep.subr.mxu0 0.0
  %1263 = vmatpush1.msra.mxu0 0.0
  %1264 = vmatprep.subr.mxu0 0.0
  %1265 = vmatpush1.msra.mxu0 0.0
  %1266 = vmatprep.subr.mxu0 0.0
  %1267 = vmatpush1.msra.mxu0 0.0
  %1268 = vmatprep.subr.mxu0 0.0
  %1269 = vmatpush1.msra.mxu0 0.0
  %1270 = vmatprep.subr.mxu0 0.0
  %1271 = vmatpush1.msra.mxu0 0.0
  %1272 = vmatprep.subr.mxu0 0.0
  %1273 = vmatpush1.msra.mxu0 0.0
  %1274 = vmatprep.subr.mxu0 0.0
  %1275 = vmatpush1.msra.mxu0 0.0
  %1276 = vmatprep.subr.mxu0 0.0
  %1277 = vmatpush1.msra.mxu0 0.0
  %1278 = vmatprep.subr.mxu0 0.0
  %1279 = vmatpush1.msra.mxu0 0.0
  %1280 = vmatprep.subr.mxu0 0.0
  %1281 = vmatpush1.msra.mxu0 0.0
  %1282 = vmatprep.subr.mxu0 0.0
  %1283 = vmatpush1.msra.mxu0 0.0
  %1284 = vmatprep.subr.mxu0 0.0
  %1285 = vmatpush1.msra.mxu0 0.0
  %1286 = vmatprep.subr.mxu0 0.0
  %1287 = vmatpush1.msra.mxu0 0.0
  %1288 = vmatprep.subr.mxu0 0.0
  %1289 = vmatpush1.msra.mxu0 0.0
  %1290 = vmatprep.subr.mxu0 0.0
  %1291 = vmatpush1.msra.mxu0 0.0
  %1292 = vmatprep.subr.mxu0 0.0
  %1293 = vmatpush1.msra.mxu0 0.0
  %1294 = vmatprep.subr.mxu0 0.0
  %1295 = vmatpush1.msra.mxu0 0.0
  %1296 = vmatprep.subr.mxu0 0.0
  %1297 = vmatpush1.msra.mxu0 0.0
  %1298 = vmatprep.subr.mxu0 0.0
  %1299 = vmatpush1.msra.mxu0 0.0
  %1300 = vmatprep.subr.mxu0 0.0
  %1301 = vmatpush1.msra.mxu0 0.0
  %1302 = vmatprep.subr.mxu0 0.0
  %1303 = vmatpush1.msra.mxu0 0.0
  %1304 = vmatprep.subr.mxu0 0.0
  %1305 = vmatpush1.msra.mxu0 0.0
  %1306 = vmatprep.subr.mxu0 0.0
  %1307 = vmatpush1.msra.mxu0 0.0
  %1308 = vmatprep.subr.mxu0 0.0
  %1309 = vmatpush1.msra.mxu0 0.0
  %1310 = vmatprep.subr.mxu0 0.0
  %1311 = vmatpush1.msra.mxu0 0.0
  %1312 = vmatprep.mubr.f32.mxu0 0.0
  %1313 = vmatmul.mubr.f32.gmra.mrb[0].mxu0 %v1243
  %v1314 = vpop.f32.mrb[0].mxu0
  %v1315 = vadd.f32 %v1240, %v1314
  %v1316 = vpop.f32.mrb[0].mxu0
  %1317 = vmatprep.mubr.f32.mxu0 0.0
  %1318 = vmatmul.mubr.f32.gmra.mrb[0].mxu0 %v1246
  %v1319 = vpop.f32.mrb[0].mxu0
  %v1320 = vadd.f32 %v1240, %v1319
  %v1321 = vpop.f32.mrb[0].mxu0
  %1322 = vdwg.mxu0
  %vm1323 = vcmask 7168
  %1324 = vst.msk [vmem:[%s6] sm:$0xff] %vm1323, %v1315
  %1325 = vst.msk [vmem:[%s6 + $0x8] sm:$0xff] %vm1323, %v1320
  // Predicated region
  $region26: #{lstm_wrapper_single_output.1} parent=0 // pred_check
    _
  $region27: #{lstm_wrapper_single_output.1} parent=0 // pred_check_branch
    %1327 = sbr.rel (0) target = $region29
  $region28: #{lstm_wrapper_single_output.1} parent=0 // pred_region
    _
  $region29: #{lstm_wrapper_single_output.1} parent=0 // pred_fallthru
    _
  // Predicated region
  $region30: #{lstm_wrapper_single_output.1} parent=0 // pred_check
    _
  $region31: #{lstm_wrapper_single_output.1} parent=0 // pred_check_branch
    %1329 = sbr.rel (0) target = $region33
  $region32: #{lstm_wrapper_single_output.1} parent=0 // pred_region
    _
  $region33: #{lstm_wrapper_single_output.1} parent=0 // pred_fallthru
    _

</llo_original>
